<compile_context>
chip_gen: v5e
topology: v5e:2x2
jax: 0.10.0
libtpu: 0.0.40
codegen_flags: <defaults>
</compile_context>

<pallas_src>
import math
import functools

import jax
import jax.numpy as jnp
from jax.experimental import pallas as pl
from jax.experimental.pallas import tpu as pltpu


def _attenion_kernel(e1_ref, e2_ref, g1_ref, g2_ref, sel_ref, maskt_ref,
                     wih1_ref, whh1_ref, b1_ref, wih2_ref, whh2_ref, b2_ref,
                     wy_ref, wh_ref, wcol_ref, wpx_ref,
                     l1w_ref, l1b_ref, lw_ref, lb_ref,
                     o_ref, *, seq1, seq2, batch, hidden):
    """Single invocation: whole batch resident in VMEM, recurrences unrolled."""
    E = hidden
    B = batch
    f32 = jnp.float32
    bf16 = jnp.bfloat16
    BIG = 1.0e12

    def dotf(a, b):
        return jnp.dot(a, b, preferred_element_type=f32)

    def sigmoid(x):
        # EUP-only sigmoid (no VALU divide on the serial chain).
        return 0.5 * jnp.tanh(0.5 * x) + 0.5

    # Hoisted loop-invariant loads (JAX does not CSE repeated loads).
    whh1 = whh1_ref[...]
    whh2 = whh2_ref[...]
    sel = sel_ref[...]

    # ---- hoisted input-to-hidden matmuls (one wide bf16 matmul per sentence) --
    x1_gates = dotf(e1_ref[...], wih1_ref[...]) + b1_ref[...]   # (S1*B, 4E) f32
    x2_gates = dotf(e2_ref[...], wih2_ref[...]) + b2_ref[...]   # (S2*B, 4E) f32

    def lstm_step(xg, h_prev, c_prev, whh):
        # Gate columns pre-ordered [i, f, o, g] in the wrapper.
        gates = xg + dotf(h_prev.astype(bf16), whh)              # (B, 4E) f32
        sgs = sigmoid(gates[:, 0:3 * E])                         # one EUP push
        i_g = sgs[:, 0:E]
        f_g = sgs[:, E:2 * E]
        o_g = sgs[:, 2 * E:3 * E]
        g_g = jnp.tanh(gates[:, 3 * E:4 * E])                    # one EUP push
        c_new = f_g * c_prev + i_g * g_g
        h_new = o_g * jnp.tanh(c_new)
        return h_new, c_new

    # ---- LSTMCell over sentence1 (states kept in registers, no VMEM scratch) --
    h = jnp.zeros((B, E), f32)
    c = jnp.zeros((B, E), f32)
    h_list = []
    c_list = []
    for t in range(seq1):
        h, c = lstm_step(x1_gates[t * B:(t + 1) * B, :], h, c, whh1)
        h_list.append(h)
        c_list.append(c)
    H1 = jnp.concatenate(h_list, axis=0)        # (S1*B, E), time-major blocks
    C1 = jnp.concatenate(c_list, axis=0)        # (S1*B, E)

    # gather (h, c) at s1_len == one-hot contraction on the MXU
    gh = dotf(g1_ref[...], H1)                  # (B, E)
    gc = dotf(g1_ref[...], C1)                  # (B, E)

    # ---- nn.LSTM over sentence2 with init (gh, gc) -----------------------------
    h2, c2 = gh, gc
    h2_list = []
    for t in range(seq2):
        h2, c2 = lstm_step(x2_gates[t * B:(t + 1) * B, :], h2, c2, whh2)
        h2_list.append(h2)
    H2 = jnp.concatenate(h2_list, axis=0)       # (S2*B, E)
    outv = dotf(g2_ref[...], H2)                # (B, E) == out.gather(1, s2_len)

    # ---- batched word-by-word attention ----------------------------------------
    ow = dotf(outv.astype(bf16), wh_ref[...])                       # (B, E)
    ow_rep = jnp.concatenate([ow] * seq1, axis=0)                   # (S1*B, E)
    m = jnp.tanh(dotf(H1.astype(bf16), wy_ref[...]) + ow_rep)       # (S1*B, E)
    scores = dotf(m.astype(bf16), wcol_ref[...])                    # (S1*B, 1)

    maskt = maskt_ref[...]                                          # (S1*B, 1)
    masked = maskt * scores - (1.0 - maskt) * BIG
    # Global-max shift: exact softmax (per-row constant shift), single reduce.
    gmax = jnp.max(masked, axis=0, keepdims=True)                   # (1, 1)
    ex = jnp.exp(masked - gmax)                                     # (S1*B, 1)
    denom = dotf(sel, ex)                                           # (B, 1)
    inv = pl.reciprocal(denom, approx=True)                         # EUP slot
    inv_rep = jnp.concatenate([inv] * seq1, axis=0)                 # (S1*B, 1)
    alpha = ex * inv_rep                                            # (S1*B, 1)
    r = dotf(sel, alpha * H1)                                       # (B, E)

    # ---- output head (fused [r, out] @ [[Wp],[Wx]]) -----------------------------
    ro = jnp.concatenate([r, outv], axis=1)                         # (B, 2E)
    h_out = jnp.tanh(dotf(ro.astype(bf16), wpx_ref[...]))           # (B, E)
    # l1 = Linear(64,128) -> Dropout -> Tanh   (Dropout is identity in eval mode)
    h_out = jnp.tanh(dotf(h_out.astype(bf16), l1w_ref[...]) + l1b_ref[...])
    # l = Linear(128, 4)
    logits = dotf(h_out.astype(bf16), lw_ref[...]) + lb_ref[...]    # (B, 4)

    # Single store of the full output block.
    o_ref[...] = logits.astype(o_ref.dtype)


def attenion_forward_pallas(sentence1, sentence2, s1_idx, s2_idx, s1_s, p):
    """sentence1/2: (B,S) int32 token ids; s1_idx/s2_idx: (B,) gather positions
    (last valid token index); s1_s: (B,S) 0/1 mask; p: parameter dict in PyTorch
    layouts."""
    B, S1 = sentence1.shape
    _, S2 = sentence2.shape
    E = 64
    f32 = jnp.float32
    bf16 = jnp.bfloat16

    # Embedding lookup + time-major flatten in the wrapper (data-dependent gather).
    emb = p["embedding"]
    e1 = jnp.transpose(jnp.take(emb, sentence1, axis=0), (1, 0, 2))  # (S1, B, 50)
    e2 = jnp.transpose(jnp.take(emb, sentence2, axis=0), (1, 0, 2))  # (S2, B, 50)
    e1 = e1.reshape(S1 * B, -1).astype(bf16)                          # (S1*B, 50)
    e2 = e2.reshape(S2 * B, -1).astype(bf16)                          # (S2*B, 50)

    # One-hot gather / selection matrices (time-major row index = t*B + b).
    oh1 = (jnp.arange(S1)[None, :] == s1_idx[:, None]).astype(f32)    # (B, S1)
    oh2 = (jnp.arange(S2)[None, :] == s2_idx[:, None]).astype(f32)    # (B, S2)
    eyeB = jnp.eye(B, dtype=f32)
    g1 = (oh1[:, :, None] * eyeB[:, None, :]).reshape(B, S1 * B)      # gather h,c
    g2 = (oh2[:, :, None] * eyeB[:, None, :]).reshape(B, S2 * B)      # gather out
    sel = jnp.tile(eyeB, (1, S1))                                     # (B, S1*B)
    maskt = jnp.transpose(s1_s.astype(f32)).reshape(S1 * B, 1)        # (S1*B, 1)

    # Reorder PyTorch gate rows [i,f,g,o] -> [i,f,o,g]; pre-transpose; bf16 cast.
    def reorder(w):
        i, f, g, o = jnp.split(w, 4, axis=0)
        return jnp.concatenate([i, f, o, g], axis=0)

    wih1T = reorder(p["w_ih1"]).T.astype(bf16)                        # (50, 4E)
    whh1T = reorder(p["w_hh1"]).T.astype(bf16)                        # (E, 4E)
    b1 = reorder(p["b_ih1"] + p["b_hh1"]).reshape(1, 4 * E)           # f32
    wih2T = reorder(p["w_ih2"]).T.astype(bf16)
    whh2T = reorder(p["w_hh2"]).T.astype(bf16)
    b2 = reorder(p["b_ih2"] + p["b_hh2"]).reshape(1, 4 * E)

    wy = p["wy"].astype(bf16)
    wh = p["wh"].astype(bf16)
    wcol = p["w"].reshape(E, 1).astype(bf16)
    wpx = jnp.concatenate([p["wp"], p["wx"]], axis=0).astype(bf16)    # (2E, E)
    l1wT = p["l1_w"].T.astype(bf16)                                   # (E, 128)
    l1b = p["l1_b"].reshape(1, -1)                                    # f32
    lwT = p["l_w"].T.astype(bf16)                                     # (128, 4)
    lb = p["l_b"].reshape(1, -1)                                      # f32

    args = (e1, e2, g1, g2, sel, maskt,
            wih1T, whh1T, b1, wih2T, whh2T, b2,
            wy, wh, wcol, wpx, l1wT, l1b, lwT, lb)

    def zero_map(ndim):
        return lambda i, _n=ndim: (0,) * _n

    in_specs = [pl.BlockSpec(tuple(a.shape), zero_map(a.ndim)) for a in args]

    kernel = functools.partial(_attenion_kernel,
                               seq1=S1, seq2=S2, batch=B, hidden=E)

    return pl.pallas_call(
        kernel,
        out_shape=jax.ShapeDtypeStruct((B, 4), jnp.float32),
        grid_spec=pltpu.PrefetchScalarGridSpec(
            num_scalar_prefetch=0,
            grid=(1,),                     # toy shapes: whole problem in one step
            in_specs=in_specs,
            out_specs=pl.BlockSpec((B, 4), lambda i: (0, 0)),
        ),
        compiler_params=pltpu.CompilerParams(
            dimension_semantics=("arbitrary",)),
    )(*args)


def attenion_ref(sentence1, sentence2, s1_idx, s2_idx, s1_s, p):
    """Pure-JAX f32 reference replicating the PyTorch forward (eval mode)."""
    E = 64
    emb = p["embedding"]
    embed1 = emb[sentence1]                 # (B, S1, 50)
    embed2 = emb[sentence2]                 # (B, S2, 50)
    B, S1, _ = embed1.shape
    S2 = embed2.shape[1]
    embed1_tm = jnp.transpose(embed1, (1, 0, 2))

    def cell(x, h, c, wih, whh, bih, bhh):
        gates = x @ wih.T + bih + h @ whh.T + bhh
        i = jax.nn.sigmoid(gates[:, 0:E])
        f = jax.nn.sigmoid(gates[:, E:2 * E])
        g = jnp.tanh(gates[:, 2 * E:3 * E])
        o = jax.nn.sigmoid(gates[:, 3 * E:4 * E])
        c = f * c + i * g
        h = o * jnp.tanh(c)
        return h, c

    h0 = jnp.zeros((B, E), jnp.float32)
    c0 = jnp.zeros((B, E), jnp.float32)
    hs, cs = [], []
    for t in range(S1):
        h0, c0 = cell(embed1_tm[t], h0, c0,
                      p["w_ih1"], p["w_hh1"], p["b_ih1"], p["b_hh1"])
        hs.append(h0)
        cs.append(c0)
    h = jnp.stack(hs, axis=1)               # (B, S1, E)
    c = jnp.stack(cs, axis=1)
    gather_h = h[jnp.arange(B), s1_idx]     # (B, E)
    gather_c = c[jnp.arange(B), s1_idx]

    h2, c2 = gather_h, gather_c
    outs = []
    for t in range(S2):
        h2, c2 = cell(embed2[:, t, :], h2, c2,
                      p["w_ih2"], p["w_hh2"], p["b_ih2"], p["b_hh2"])
        outs.append(h2)
    out_seq = jnp.stack(outs, axis=1)       # (B, S2, E)
    out = out_seq[jnp.arange(B), s2_idx]    # (B, E)

    wyy = h @ p["wy"]                                        # (B, S1, E)
    M = jnp.tanh(wyy + (out @ p["wh"])[:, None, :])
    wtm = jnp.einsum("bse,e->bs", M, p["w"])                 # (B, S1)
    scores = s1_s * wtm - (1.0 - s1_s) * 1.0e12
    soft = jax.nn.softmax(scores, axis=1)
    r = jnp.sum(h * soft[:, :, None], axis=1)                # (B, E)
    h_out = jnp.tanh(r @ p["wp"] + out @ p["wx"])
    h_out = jnp.tanh(h_out @ p["l1_w"].T + p["l1_b"])        # Dropout: identity (eval)
    logits = h_out @ p["l_w"].T + p["l_b"]
    return logits


if __name__ == "__main__":
    # Small shapes consistent with the module: batch=2, seq=8, embed=50, hidden=64.
    B, S, VOCAB, EMB, E = 2, 8, 40, 50, 64

    key = jax.random.PRNGKey(0)
    kit = iter(jax.random.split(key, 32))

    def nxt():
        return next(kit)

    def uni(shape, bound):
        return jax.random.uniform(nxt(), shape, dtype=jnp.float32,
                                  minval=-bound, maxval=bound)

    kstd = math.sqrt(2.0 / E)
    lstm_b = 1.0 / math.sqrt(E)
    p = {
        "embedding": jax.random.normal(nxt(), (VOCAB + 4, EMB), dtype=jnp.float32),
        "w_ih1": uni((4 * E, EMB), lstm_b), "w_hh1": uni((4 * E, E), lstm_b),
        "b_ih1": uni((4 * E,), lstm_b),     "b_hh1": uni((4 * E,), lstm_b),
        "w_ih2": uni((4 * E, EMB), lstm_b), "w_hh2": uni((4 * E, E), lstm_b),
        "b_ih2": uni((4 * E,), lstm_b),     "b_hh2": uni((4 * E,), lstm_b),
        "wy": kstd * jax.random.normal(nxt(), (E, E), dtype=jnp.float32),
        "wh": kstd * jax.random.normal(nxt(), (E, E), dtype=jnp.float32),
        "w": jax.random.normal(nxt(), (E,), dtype=jnp.float32),
        "wp": kstd * jax.random.normal(nxt(), (E, E), dtype=jnp.float32),
        "wx": kstd * jax.random.normal(nxt(), (E, E), dtype=jnp.float32),
        "l1_w": uni((128, E), 1.0 / math.sqrt(E)), "l1_b": uni((128,), 1.0 / math.sqrt(E)),
        "l_w": uni((4, 128), 1.0 / math.sqrt(128)), "l_b": uni((4,), 1.0 / math.sqrt(128)),
    }

    sentence1 = jax.random.randint(nxt(), (B, S), 0, VOCAB + 4).astype(jnp.int32)
    sentence2 = jax.random.randint(nxt(), (B, S), 0, VOCAB + 4).astype(jnp.int32)
    s1_idx = jnp.array([S - 1, 5], dtype=jnp.int32)   # last valid token of sentence1
    s2_idx = jnp.array([S - 1, 6], dtype=jnp.int32)   # last valid token of sentence2
    s1_s = jnp.array([[1.0] * S, [1.0] * 6 + [0.0] * 2], dtype=jnp.float32)

    out = attenion_forward_pallas(sentence1, sentence2, s1_idx, s2_idx, s1_s, p)
    out = jax.block_until_ready(out)

    ref = attenion_ref(sentence1, sentence2, s1_idx, s2_idx, s1_s, p)
    assert out.shape == (B, 4)
    # Tolerance loosened vs the all-f32 version: MXU operands are bf16 (per the
    # performance review) while the reference runs the 16-step recurrence in f32;
    # expected |delta| is ~1e-2 on O(0.3) logits.
    assert jnp.allclose(out, ref, atol=5e-2, rtol=5e-2), "mismatch vs reference"

    print("KERNEL_OK")
</pallas_src>

<mosaic_0001>
module attributes {stable_mosaic.version = 11 : i64} {
  func.func @_attenion_kernel(%arg0: i32, %arg1: memref<16x50xbf16, #tpu.memory_space<vmem>>, %arg2: memref<16x50xbf16, #tpu.memory_space<vmem>>, %arg3: memref<2x16xf32, #tpu.memory_space<vmem>>, %arg4: memref<2x16xf32, #tpu.memory_space<vmem>>, %arg5: memref<2x16xf32, #tpu.memory_space<vmem>>, %arg6: memref<16x1xf32, #tpu.memory_space<vmem>>, %arg7: memref<50x256xbf16, #tpu.memory_space<vmem>>, %arg8: memref<64x256xbf16, #tpu.memory_space<vmem>>, %arg9: memref<1x256xf32, #tpu.memory_space<vmem>>, %arg10: memref<50x256xbf16, #tpu.memory_space<vmem>>, %arg11: memref<64x256xbf16, #tpu.memory_space<vmem>>, %arg12: memref<1x256xf32, #tpu.memory_space<vmem>>, %arg13: memref<64x64xbf16, #tpu.memory_space<vmem>>, %arg14: memref<64x64xbf16, #tpu.memory_space<vmem>>, %arg15: memref<64x1xbf16, #tpu.memory_space<vmem>>, %arg16: memref<128x64xbf16, #tpu.memory_space<vmem>>, %arg17: memref<64x128xbf16, #tpu.memory_space<vmem>>, %arg18: memref<1x128xf32, #tpu.memory_space<vmem>>, %arg19: memref<128x4xbf16, #tpu.memory_space<vmem>>, %arg20: memref<1x4xf32, #tpu.memory_space<vmem>>, %arg21: memref<2x4xf32, #tpu.memory_space<vmem>>) attributes {dimension_semantics = [#tpu.dimension_semantics<arbitrary>], iteration_bounds = array<i64: 1>, scalar_prefetch = 0 : i64, scratch_operands = 0 : i64, tpu.core_type = #tpu.core_type<tc>, window_params = [{pipeline_mode = #tpu.pipeline_mode<synchronous>, transform_indices = @transform_0, window_bounds = array<i64: 16, 50>}, {pipeline_mode = #tpu.pipeline_mode<synchronous>, transform_indices = @transform_1, window_bounds = array<i64: 16, 50>}, {pipeline_mode = #tpu.pipeline_mode<synchronous>, transform_indices = @transform_2, window_bounds = array<i64: 2, 16>}, {pipeline_mode = #tpu.pipeline_mode<synchronous>, transform_indices = @transform_3, window_bounds = array<i64: 2, 16>}, {pipeline_mode = #tpu.pipeline_mode<synchronous>, transform_indices = @transform_4, window_bounds = array<i64: 2, 16>}, {pipeline_mode = #tpu.pipeline_mode<synchronous>, transform_indices = @transform_5, window_bounds = array<i64: 16, 1>}, {pipeline_mode = #tpu.pipeline_mode<synchronous>, transform_indices = @transform_6, window_bounds = array<i64: 50, 256>}, {pipeline_mode = #tpu.pipeline_mode<synchronous>, transform_indices = @transform_7, window_bounds = array<i64: 64, 256>}, {pipeline_mode = #tpu.pipeline_mode<synchronous>, transform_indices = @transform_8, window_bounds = array<i64: 1, 256>}, {pipeline_mode = #tpu.pipeline_mode<synchronous>, transform_indices = @transform_9, window_bounds = array<i64: 50, 256>}, {pipeline_mode = #tpu.pipeline_mode<synchronous>, transform_indices = @transform_10, window_bounds = array<i64: 64, 256>}, {pipeline_mode = #tpu.pipeline_mode<synchronous>, transform_indices = @transform_11, window_bounds = array<i64: 1, 256>}, {pipeline_mode = #tpu.pipeline_mode<synchronous>, transform_indices = @transform_12, window_bounds = array<i64: 64, 64>}, {pipeline_mode = #tpu.pipeline_mode<synchronous>, transform_indices = @transform_13, window_bounds = array<i64: 64, 64>}, {pipeline_mode = #tpu.pipeline_mode<synchronous>, transform_indices = @transform_14, window_bounds = array<i64: 64, 1>}, {pipeline_mode = #tpu.pipeline_mode<synchronous>, transform_indices = @transform_15, window_bounds = array<i64: 128, 64>}, {pipeline_mode = #tpu.pipeline_mode<synchronous>, transform_indices = @transform_16, window_bounds = array<i64: 64, 128>}, {pipeline_mode = #tpu.pipeline_mode<synchronous>, transform_indices = @transform_17, window_bounds = array<i64: 1, 128>}, {pipeline_mode = #tpu.pipeline_mode<synchronous>, transform_indices = @transform_18, window_bounds = array<i64: 128, 4>}, {pipeline_mode = #tpu.pipeline_mode<synchronous>, transform_indices = @transform_19, window_bounds = array<i64: 1, 4>}, {pipeline_mode = #tpu.pipeline_mode<synchronous>, transform_indices = @transform_20, window_bounds = array<i64: 2, 4>}]} {
    %c0 = arith.constant 0 : index
    %c0_0 = arith.constant 0 : index
    %0 = vector.load %arg8[%c0, %c0_0] : memref<64x256xbf16, #tpu.memory_space<vmem>>, vector<64x256xbf16>
    %c0_1 = arith.constant 0 : index
    %c0_2 = arith.constant 0 : index
    %1 = vector.load %arg11[%c0_1, %c0_2] : memref<64x256xbf16, #tpu.memory_space<vmem>>, vector<64x256xbf16>
    %c0_3 = arith.constant 0 : index
    %c0_4 = arith.constant 0 : index
    %2 = vector.load %arg5[%c0_3, %c0_4] : memref<2x16xf32, #tpu.memory_space<vmem>>, vector<2x16xf32>
    %c0_5 = arith.constant 0 : index
    %c0_6 = arith.constant 0 : index
    %3 = vector.load %arg1[%c0_5, %c0_6] : memref<16x50xbf16, #tpu.memory_space<vmem>>, vector<16x50xbf16>
    %c0_7 = arith.constant 0 : index
    %c0_8 = arith.constant 0 : index
    %4 = vector.load %arg7[%c0_7, %c0_8] : memref<50x256xbf16, #tpu.memory_space<vmem>>, vector<50x256xbf16>
    %cst = arith.constant dense<0.000000e+00> : vector<16x256xf32>
    %5 = tpu.matmul %3, %4, %cst {dimension_numbers = #tpu.dot_dimension_numbers<[1], [0], [0], [1], [0, 0, 1, 1], [], []>} : vector<16x50xbf16>, vector<50x256xbf16>, vector<16x256xf32> -> vector<16x256xf32>
    %c0_9 = arith.constant 0 : index
    %c0_10 = arith.constant 0 : index
    %6 = vector.load %arg9[%c0_9, %c0_10] : memref<1x256xf32, #tpu.memory_space<vmem>>, vector<1x256xf32>
    %7 = vector.broadcast %6 : vector<1x256xf32> to vector<16x256xf32>
    %8 = arith.addf %5, %7 : vector<16x256xf32>
    %c0_11 = arith.constant 0 : index
    %c0_12 = arith.constant 0 : index
    %9 = vector.load %arg2[%c0_11, %c0_12] : memref<16x50xbf16, #tpu.memory_space<vmem>>, vector<16x50xbf16>
    %c0_13 = arith.constant 0 : index
    %c0_14 = arith.constant 0 : index
    %10 = vector.load %arg10[%c0_13, %c0_14] : memref<50x256xbf16, #tpu.memory_space<vmem>>, vector<50x256xbf16>
    %cst_15 = arith.constant dense<0.000000e+00> : vector<16x256xf32>
    %11 = tpu.matmul %9, %10, %cst_15 {dimension_numbers = #tpu.dot_dimension_numbers<[1], [0], [0], [1], [0, 0, 1, 1], [], []>} : vector<16x50xbf16>, vector<50x256xbf16>, vector<16x256xf32> -> vector<16x256xf32>
    %c0_16 = arith.constant 0 : index
    %c0_17 = arith.constant 0 : index
    %12 = vector.load %arg12[%c0_16, %c0_17] : memref<1x256xf32, #tpu.memory_space<vmem>>, vector<1x256xf32>
    %13 = vector.broadcast %12 : vector<1x256xf32> to vector<16x256xf32>
    %14 = arith.addf %11, %13 : vector<16x256xf32>
    %cst_18 = arith.constant 0.000000e+00 : f32
    %15 = vector.broadcast %cst_18 : f32 to vector<2x64xf32>
    %cst_19 = arith.constant 0.000000e+00 : f32
    %16 = vector.broadcast %cst_19 : f32 to vector<2x64xf32>
    %17 = vector.extract_strided_slice %8 {offsets = [0, 0], sizes = [2, 256], strides = [1, 1]} : vector<16x256xf32> to vector<2x256xf32>
    %18 = arith.truncf %15 : vector<2x64xf32> to vector<2x64xbf16>
    %cst_20 = arith.constant dense<0.000000e+00> : vector<2x256xf32>
    %19 = tpu.matmul %18, %0, %cst_20 {dimension_numbers = #tpu.dot_dimension_numbers<[1], [0], [0], [1], [0, 0, 1, 1], [], []>} : vector<2x64xbf16>, vector<64x256xbf16>, vector<2x256xf32> -> vector<2x256xf32>
    %20 = arith.addf %17, %19 : vector<2x256xf32>
    %21 = vector.extract_strided_slice %20 {offsets = [0, 0], sizes = [2, 192], strides = [1, 1]} : vector<2x256xf32> to vector<2x192xf32>
    %cst_21 = arith.constant 5.000000e-01 : f32
    %22 = vector.broadcast %cst_21 : f32 to vector<2x192xf32>
    %23 = arith.mulf %22, %21 : vector<2x192xf32>
    %24 = math.tanh %23 : vector<2x192xf32>
    %cst_22 = arith.constant 5.000000e-01 : f32
    %25 = vector.broadcast %cst_22 : f32 to vector<2x192xf32>
    %26 = arith.mulf %25, %24 : vector<2x192xf32>
    %cst_23 = arith.constant 5.000000e-01 : f32
    %27 = vector.broadcast %cst_23 : f32 to vector<2x192xf32>
    %28 = arith.addf %26, %27 : vector<2x192xf32>
    %29 = vector.extract_strided_slice %28 {offsets = [0, 0], sizes = [2, 64], strides = [1, 1]} : vector<2x192xf32> to vector<2x64xf32>
    %30 = vector.extract_strided_slice %28 {offsets = [0, 64], sizes = [2, 64], strides = [1, 1]} : vector<2x192xf32> to vector<2x64xf32>
    %31 = vector.extract_strided_slice %28 {offsets = [0, 128], sizes = [2, 64], strides = [1, 1]} : vector<2x192xf32> to vector<2x64xf32>
    %32 = vector.extract_strided_slice %20 {offsets = [0, 192], sizes = [2, 64], strides = [1, 1]} : vector<2x256xf32> to vector<2x64xf32>
    %33 = math.tanh %32 : vector<2x64xf32>
    %34 = arith.mulf %30, %16 : vector<2x64xf32>
    %35 = arith.mulf %29, %33 : vector<2x64xf32>
    %36 = arith.addf %34, %35 : vector<2x64xf32>
    %37 = math.tanh %36 : vector<2x64xf32>
    %38 = arith.mulf %31, %37 : vector<2x64xf32>
    %39 = vector.extract_strided_slice %8 {offsets = [2, 0], sizes = [2, 256], strides = [1, 1]} : vector<16x256xf32> to vector<2x256xf32>
    %40 = arith.truncf %38 : vector<2x64xf32> to vector<2x64xbf16>
    %cst_24 = arith.constant dense<0.000000e+00> : vector<2x256xf32>
    %41 = tpu.matmul %40, %0, %cst_24 {dimension_numbers = #tpu.dot_dimension_numbers<[1], [0], [0], [1], [0, 0, 1, 1], [], []>} : vector<2x64xbf16>, vector<64x256xbf16>, vector<2x256xf32> -> vector<2x256xf32>
    %42 = arith.addf %39, %41 : vector<2x256xf32>
    %43 = vector.extract_strided_slice %42 {offsets = [0, 0], sizes = [2, 192], strides = [1, 1]} : vector<2x256xf32> to vector<2x192xf32>
    %cst_25 = arith.constant 5.000000e-01 : f32
    %44 = vector.broadcast %cst_25 : f32 to vector<2x192xf32>
    %45 = arith.mulf %44, %43 : vector<2x192xf32>
    %46 = math.tanh %45 : vector<2x192xf32>
    %cst_26 = arith.constant 5.000000e-01 : f32
    %47 = vector.broadcast %cst_26 : f32 to vector<2x192xf32>
    %48 = arith.mulf %47, %46 : vector<2x192xf32>
    %cst_27 = arith.constant 5.000000e-01 : f32
    %49 = vector.broadcast %cst_27 : f32 to vector<2x192xf32>
    %50 = arith.addf %48, %49 : vector<2x192xf32>
    %51 = vector.extract_strided_slice %50 {offsets = [0, 0], sizes = [2, 64], strides = [1, 1]} : vector<2x192xf32> to vector<2x64xf32>
    %52 = vector.extract_strided_slice %50 {offsets = [0, 64], sizes = [2, 64], strides = [1, 1]} : vector<2x192xf32> to vector<2x64xf32>
    %53 = vector.extract_strided_slice %50 {offsets = [0, 128], sizes = [2, 64], strides = [1, 1]} : vector<2x192xf32> to vector<2x64xf32>
    %54 = vector.extract_strided_slice %42 {offsets = [0, 192], sizes = [2, 64], strides = [1, 1]} : vector<2x256xf32> to vector<2x64xf32>
    %55 = math.tanh %54 : vector<2x64xf32>
    %56 = arith.mulf %52, %36 : vector<2x64xf32>
    %57 = arith.mulf %51, %55 : vector<2x64xf32>
    %58 = arith.addf %56, %57 : vector<2x64xf32>
    %59 = math.tanh %58 : vector<2x64xf32>
    %60 = arith.mulf %53, %59 : vector<2x64xf32>
    %61 = vector.extract_strided_slice %8 {offsets = [4, 0], sizes = [2, 256], strides = [1, 1]} : vector<16x256xf32> to vector<2x256xf32>
    %62 = arith.truncf %60 : vector<2x64xf32> to vector<2x64xbf16>
    %cst_28 = arith.constant dense<0.000000e+00> : vector<2x256xf32>
    %63 = tpu.matmul %62, %0, %cst_28 {dimension_numbers = #tpu.dot_dimension_numbers<[1], [0], [0], [1], [0, 0, 1, 1], [], []>} : vector<2x64xbf16>, vector<64x256xbf16>, vector<2x256xf32> -> vector<2x256xf32>
    %64 = arith.addf %61, %63 : vector<2x256xf32>
    %65 = vector.extract_strided_slice %64 {offsets = [0, 0], sizes = [2, 192], strides = [1, 1]} : vector<2x256xf32> to vector<2x192xf32>
    %cst_29 = arith.constant 5.000000e-01 : f32
    %66 = vector.broadcast %cst_29 : f32 to vector<2x192xf32>
    %67 = arith.mulf %66, %65 : vector<2x192xf32>
    %68 = math.tanh %67 : vector<2x192xf32>
    %cst_30 = arith.constant 5.000000e-01 : f32
    %69 = vector.broadcast %cst_30 : f32 to vector<2x192xf32>
    %70 = arith.mulf %69, %68 : vector<2x192xf32>
    %cst_31 = arith.constant 5.000000e-01 : f32
    %71 = vector.broadcast %cst_31 : f32 to vector<2x192xf32>
    %72 = arith.addf %70, %71 : vector<2x192xf32>
    %73 = vector.extract_strided_slice %72 {offsets = [0, 0], sizes = [2, 64], strides = [1, 1]} : vector<2x192xf32> to vector<2x64xf32>
    %74 = vector.extract_strided_slice %72 {offsets = [0, 64], sizes = [2, 64], strides = [1, 1]} : vector<2x192xf32> to vector<2x64xf32>
    %75 = vector.extract_strided_slice %72 {offsets = [0, 128], sizes = [2, 64], strides = [1, 1]} : vector<2x192xf32> to vector<2x64xf32>
    %76 = vector.extract_strided_slice %64 {offsets = [0, 192], sizes = [2, 64], strides = [1, 1]} : vector<2x256xf32> to vector<2x64xf32>
    %77 = math.tanh %76 : vector<2x64xf32>
    %78 = arith.mulf %74, %58 : vector<2x64xf32>
    %79 = arith.mulf %73, %77 : vector<2x64xf32>
    %80 = arith.addf %78, %79 : vector<2x64xf32>
    %81 = math.tanh %80 : vector<2x64xf32>
    %82 = arith.mulf %75, %81 : vector<2x64xf32>
    %83 = vector.extract_strided_slice %8 {offsets = [6, 0], sizes = [2, 256], strides = [1, 1]} : vector<16x256xf32> to vector<2x256xf32>
    %84 = arith.truncf %82 : vector<2x64xf32> to vector<2x64xbf16>
    %cst_32 = arith.constant dense<0.000000e+00> : vector<2x256xf32>
    %85 = tpu.matmul %84, %0, %cst_32 {dimension_numbers = #tpu.dot_dimension_numbers<[1], [0], [0], [1], [0, 0, 1, 1], [], []>} : vector<2x64xbf16>, vector<64x256xbf16>, vector<2x256xf32> -> vector<2x256xf32>
    %86 = arith.addf %83, %85 : vector<2x256xf32>
    %87 = vector.extract_strided_slice %86 {offsets = [0, 0], sizes = [2, 192], strides = [1, 1]} : vector<2x256xf32> to vector<2x192xf32>
    %cst_33 = arith.constant 5.000000e-01 : f32
    %88 = vector.broadcast %cst_33 : f32 to vector<2x192xf32>
    %89 = arith.mulf %88, %87 : vector<2x192xf32>
    %90 = math.tanh %89 : vector<2x192xf32>
    %cst_34 = arith.constant 5.000000e-01 : f32
    %91 = vector.broadcast %cst_34 : f32 to vector<2x192xf32>
    %92 = arith.mulf %91, %90 : vector<2x192xf32>
    %cst_35 = arith.constant 5.000000e-01 : f32
    %93 = vector.broadcast %cst_35 : f32 to vector<2x192xf32>
    %94 = arith.addf %92, %93 : vector<2x192xf32>
    %95 = vector.extract_strided_slice %94 {offsets = [0, 0], sizes = [2, 64], strides = [1, 1]} : vector<2x192xf32> to vector<2x64xf32>
    %96 = vector.extract_strided_slice %94 {offsets = [0, 64], sizes = [2, 64], strides = [1, 1]} : vector<2x192xf32> to vector<2x64xf32>
    %97 = vector.extract_strided_slice %94 {offsets = [0, 128], sizes = [2, 64], strides = [1, 1]} : vector<2x192xf32> to vector<2x64xf32>
    %98 = vector.extract_strided_slice %86 {offsets = [0, 192], sizes = [2, 64], strides = [1, 1]} : vector<2x256xf32> to vector<2x64xf32>
    %99 = math.tanh %98 : vector<2x64xf32>
    %100 = arith.mulf %96, %80 : vector<2x64xf32>
    %101 = arith.mulf %95, %99 : vector<2x64xf32>
    %102 = arith.addf %100, %101 : vector<2x64xf32>
    %103 = math.tanh %102 : vector<2x64xf32>
    %104 = arith.mulf %97, %103 : vector<2x64xf32>
    %105 = vector.extract_strided_slice %8 {offsets = [8, 0], sizes = [2, 256], strides = [1, 1]} : vector<16x256xf32> to vector<2x256xf32>
    %106 = arith.truncf %104 : vector<2x64xf32> to vector<2x64xbf16>
    %cst_36 = arith.constant dense<0.000000e+00> : vector<2x256xf32>
    %107 = tpu.matmul %106, %0, %cst_36 {dimension_numbers = #tpu.dot_dimension_numbers<[1], [0], [0], [1], [0, 0, 1, 1], [], []>} : vector<2x64xbf16>, vector<64x256xbf16>, vector<2x256xf32> -> vector<2x256xf32>
    %108 = arith.addf %105, %107 : vector<2x256xf32>
    %109 = vector.extract_strided_slice %108 {offsets = [0, 0], sizes = [2, 192], strides = [1, 1]} : vector<2x256xf32> to vector<2x192xf32>
    %cst_37 = arith.constant 5.000000e-01 : f32
    %110 = vector.broadcast %cst_37 : f32 to vector<2x192xf32>
    %111 = arith.mulf %110, %109 : vector<2x192xf32>
    %112 = math.tanh %111 : vector<2x192xf32>
    %cst_38 = arith.constant 5.000000e-01 : f32
    %113 = vector.broadcast %cst_38 : f32 to vector<2x192xf32>
    %114 = arith.mulf %113, %112 : vector<2x192xf32>
    %cst_39 = arith.constant 5.000000e-01 : f32
    %115 = vector.broadcast %cst_39 : f32 to vector<2x192xf32>
    %116 = arith.addf %114, %115 : vector<2x192xf32>
    %117 = vector.extract_strided_slice %116 {offsets = [0, 0], sizes = [2, 64], strides = [1, 1]} : vector<2x192xf32> to vector<2x64xf32>
    %118 = vector.extract_strided_slice %116 {offsets = [0, 64], sizes = [2, 64], strides = [1, 1]} : vector<2x192xf32> to vector<2x64xf32>
    %119 = vector.extract_strided_slice %116 {offsets = [0, 128], sizes = [2, 64], strides = [1, 1]} : vector<2x192xf32> to vector<2x64xf32>
    %120 = vector.extract_strided_slice %108 {offsets = [0, 192], sizes = [2, 64], strides = [1, 1]} : vector<2x256xf32> to vector<2x64xf32>
    %121 = math.tanh %120 : vector<2x64xf32>
    %122 = arith.mulf %118, %102 : vector<2x64xf32>
    %123 = arith.mulf %117, %121 : vector<2x64xf32>
    %124 = arith.addf %122, %123 : vector<2x64xf32>
    %125 = math.tanh %124 : vector<2x64xf32>
    %126 = arith.mulf %119, %125 : vector<2x64xf32>
    %127 = vector.extract_strided_slice %8 {offsets = [10, 0], sizes = [2, 256], strides = [1, 1]} : vector<16x256xf32> to vector<2x256xf32>
    %128 = arith.truncf %126 : vector<2x64xf32> to vector<2x64xbf16>
    %cst_40 = arith.constant dense<0.000000e+00> : vector<2x256xf32>
    %129 = tpu.matmul %128, %0, %cst_40 {dimension_numbers = #tpu.dot_dimension_numbers<[1], [0], [0], [1], [0, 0, 1, 1], [], []>} : vector<2x64xbf16>, vector<64x256xbf16>, vector<2x256xf32> -> vector<2x256xf32>
    %130 = arith.addf %127, %129 : vector<2x256xf32>
    %131 = vector.extract_strided_slice %130 {offsets = [0, 0], sizes = [2, 192], strides = [1, 1]} : vector<2x256xf32> to vector<2x192xf32>
    %cst_41 = arith.constant 5.000000e-01 : f32
    %132 = vector.broadcast %cst_41 : f32 to vector<2x192xf32>
    %133 = arith.mulf %132, %131 : vector<2x192xf32>
    %134 = math.tanh %133 : vector<2x192xf32>
    %cst_42 = arith.constant 5.000000e-01 : f32
    %135 = vector.broadcast %cst_42 : f32 to vector<2x192xf32>
    %136 = arith.mulf %135, %134 : vector<2x192xf32>
    %cst_43 = arith.constant 5.000000e-01 : f32
    %137 = vector.broadcast %cst_43 : f32 to vector<2x192xf32>
    %138 = arith.addf %136, %137 : vector<2x192xf32>
    %139 = vector.extract_strided_slice %138 {offsets = [0, 0], sizes = [2, 64], strides = [1, 1]} : vector<2x192xf32> to vector<2x64xf32>
    %140 = vector.extract_strided_slice %138 {offsets = [0, 64], sizes = [2, 64], strides = [1, 1]} : vector<2x192xf32> to vector<2x64xf32>
    %141 = vector.extract_strided_slice %138 {offsets = [0, 128], sizes = [2, 64], strides = [1, 1]} : vector<2x192xf32> to vector<2x64xf32>
    %142 = vector.extract_strided_slice %130 {offsets = [0, 192], sizes = [2, 64], strides = [1, 1]} : vector<2x256xf32> to vector<2x64xf32>
    %143 = math.tanh %142 : vector<2x64xf32>
    %144 = arith.mulf %140, %124 : vector<2x64xf32>
    %145 = arith.mulf %139, %143 : vector<2x64xf32>
    %146 = arith.addf %144, %145 : vector<2x64xf32>
    %147 = math.tanh %146 : vector<2x64xf32>
    %148 = arith.mulf %141, %147 : vector<2x64xf32>
    %149 = vector.extract_strided_slice %8 {offsets = [12, 0], sizes = [2, 256], strides = [1, 1]} : vector<16x256xf32> to vector<2x256xf32>
    %150 = arith.truncf %148 : vector<2x64xf32> to vector<2x64xbf16>
    %cst_44 = arith.constant dense<0.000000e+00> : vector<2x256xf32>
    %151 = tpu.matmul %150, %0, %cst_44 {dimension_numbers = #tpu.dot_dimension_numbers<[1], [0], [0], [1], [0, 0, 1, 1], [], []>} : vector<2x64xbf16>, vector<64x256xbf16>, vector<2x256xf32> -> vector<2x256xf32>
    %152 = arith.addf %149, %151 : vector<2x256xf32>
    %153 = vector.extract_strided_slice %152 {offsets = [0, 0], sizes = [2, 192], strides = [1, 1]} : vector<2x256xf32> to vector<2x192xf32>
    %cst_45 = arith.constant 5.000000e-01 : f32
    %154 = vector.broadcast %cst_45 : f32 to vector<2x192xf32>
    %155 = arith.mulf %154, %153 : vector<2x192xf32>
    %156 = math.tanh %155 : vector<2x192xf32>
    %cst_46 = arith.constant 5.000000e-01 : f32
    %157 = vector.broadcast %cst_46 : f32 to vector<2x192xf32>
    %158 = arith.mulf %157, %156 : vector<2x192xf32>
    %cst_47 = arith.constant 5.000000e-01 : f32
    %159 = vector.broadcast %cst_47 : f32 to vector<2x192xf32>
    %160 = arith.addf %158, %159 : vector<2x192xf32>
    %161 = vector.extract_strided_slice %160 {offsets = [0, 0], sizes = [2, 64], strides = [1, 1]} : vector<2x192xf32> to vector<2x64xf32>
    %162 = vector.extract_strided_slice %160 {offsets = [0, 64], sizes = [2, 64], strides = [1, 1]} : vector<2x192xf32> to vector<2x64xf32>
    %163 = vector.extract_strided_slice %160 {offsets = [0, 128], sizes = [2, 64], strides = [1, 1]} : vector<2x192xf32> to vector<2x64xf32>
    %164 = vector.extract_strided_slice %152 {offsets = [0, 192], sizes = [2, 64], strides = [1, 1]} : vector<2x256xf32> to vector<2x64xf32>
    %165 = math.tanh %164 : vector<2x64xf32>
    %166 = arith.mulf %162, %146 : vector<2x64xf32>
    %167 = arith.mulf %161, %165 : vector<2x64xf32>
    %168 = arith.addf %166, %167 : vector<2x64xf32>
    %169 = math.tanh %168 : vector<2x64xf32>
    %170 = arith.mulf %163, %169 : vector<2x64xf32>
    %171 = vector.extract_strided_slice %8 {offsets = [14, 0], sizes = [2, 256], strides = [1, 1]} : vector<16x256xf32> to vector<2x256xf32>
    %172 = arith.truncf %170 : vector<2x64xf32> to vector<2x64xbf16>
    %cst_48 = arith.constant dense<0.000000e+00> : vector<2x256xf32>
    %173 = tpu.matmul %172, %0, %cst_48 {dimension_numbers = #tpu.dot_dimension_numbers<[1], [0], [0], [1], [0, 0, 1, 1], [], []>} : vector<2x64xbf16>, vector<64x256xbf16>, vector<2x256xf32> -> vector<2x256xf32>
    %174 = arith.addf %171, %173 : vector<2x256xf32>
    %175 = vector.extract_strided_slice %174 {offsets = [0, 0], sizes = [2, 192], strides = [1, 1]} : vector<2x256xf32> to vector<2x192xf32>
    %cst_49 = arith.constant 5.000000e-01 : f32
    %176 = vector.broadcast %cst_49 : f32 to vector<2x192xf32>
    %177 = arith.mulf %176, %175 : vector<2x192xf32>
    %178 = math.tanh %177 : vector<2x192xf32>
    %cst_50 = arith.constant 5.000000e-01 : f32
    %179 = vector.broadcast %cst_50 : f32 to vector<2x192xf32>
    %180 = arith.mulf %179, %178 : vector<2x192xf32>
    %cst_51 = arith.constant 5.000000e-01 : f32
    %181 = vector.broadcast %cst_51 : f32 to vector<2x192xf32>
    %182 = arith.addf %180, %181 : vector<2x192xf32>
    %183 = vector.extract_strided_slice %182 {offsets = [0, 0], sizes = [2, 64], strides = [1, 1]} : vector<2x192xf32> to vector<2x64xf32>
    %184 = vector.extract_strided_slice %182 {offsets = [0, 64], sizes = [2, 64], strides = [1, 1]} : vector<2x192xf32> to vector<2x64xf32>
    %185 = vector.extract_strided_slice %182 {offsets = [0, 128], sizes = [2, 64], strides = [1, 1]} : vector<2x192xf32> to vector<2x64xf32>
    %186 = vector.extract_strided_slice %174 {offsets = [0, 192], sizes = [2, 64], strides = [1, 1]} : vector<2x256xf32> to vector<2x64xf32>
    %187 = math.tanh %186 : vector<2x64xf32>
    %188 = arith.mulf %184, %168 : vector<2x64xf32>
    %189 = arith.mulf %183, %187 : vector<2x64xf32>
    %190 = arith.addf %188, %189 : vector<2x64xf32>
    %191 = math.tanh %190 : vector<2x64xf32>
    %192 = arith.mulf %185, %191 : vector<2x64xf32>
    %193 = tpu.concatenate %38, %60, %82, %104, %126, %148, %170, %192 in 0 : vector<2x64xf32>, vector<2x64xf32>, vector<2x64xf32>, vector<2x64xf32>, vector<2x64xf32>, vector<2x64xf32>, vector<2x64xf32>, vector<2x64xf32> -> vector<16x64xf32>
    %194 = tpu.concatenate %36, %58, %80, %102, %124, %146, %168, %190 in 0 : vector<2x64xf32>, vector<2x64xf32>, vector<2x64xf32>, vector<2x64xf32>, vector<2x64xf32>, vector<2x64xf32>, vector<2x64xf32>, vector<2x64xf32> -> vector<16x64xf32>
    %c0_52 = arith.constant 0 : index
    %c0_53 = arith.constant 0 : index
    %195 = vector.load %arg3[%c0_52, %c0_53] : memref<2x16xf32, #tpu.memory_space<vmem>>, vector<2x16xf32>
    %cst_54 = arith.constant dense<0.000000e+00> : vector<2x64xf32>
    %196 = tpu.matmul %195, %193, %cst_54 {dimension_numbers = #tpu.dot_dimension_numbers<[1], [0], [0], [1], [0, 0, 1, 1], [], []>} : vector<2x16xf32>, vector<16x64xf32>, vector<2x64xf32> -> vector<2x64xf32>
    %c0_55 = arith.constant 0 : index
    %c0_56 = arith.constant 0 : index
    %197 = vector.load %arg3[%c0_55, %c0_56] : memref<2x16xf32, #tpu.memory_space<vmem>>, vector<2x16xf32>
    %cst_57 = arith.constant dense<0.000000e+00> : vector<2x64xf32>
    %198 = tpu.matmul %197, %194, %cst_57 {dimension_numbers = #tpu.dot_dimension_numbers<[1], [0], [0], [1], [0, 0, 1, 1], [], []>} : vector<2x16xf32>, vector<16x64xf32>, vector<2x64xf32> -> vector<2x64xf32>
    %199 = vector.extract_strided_slice %14 {offsets = [0, 0], sizes = [2, 256], strides = [1, 1]} : vector<16x256xf32> to vector<2x256xf32>
    %200 = arith.truncf %196 : vector<2x64xf32> to vector<2x64xbf16>
    %cst_58 = arith.constant dense<0.000000e+00> : vector<2x256xf32>
    %201 = tpu.matmul %200, %1, %cst_58 {dimension_numbers = #tpu.dot_dimension_numbers<[1], [0], [0], [1], [0, 0, 1, 1], [], []>} : vector<2x64xbf16>, vector<64x256xbf16>, vector<2x256xf32> -> vector<2x256xf32>
    %202 = arith.addf %199, %201 : vector<2x256xf32>
    %203 = vector.extract_strided_slice %202 {offsets = [0, 0], sizes = [2, 192], strides = [1, 1]} : vector<2x256xf32> to vector<2x192xf32>
    %cst_59 = arith.constant 5.000000e-01 : f32
    %204 = vector.broadcast %cst_59 : f32 to vector<2x192xf32>
    %205 = arith.mulf %204, %203 : vector<2x192xf32>
    %206 = math.tanh %205 : vector<2x192xf32>
    %cst_60 = arith.constant 5.000000e-01 : f32
    %207 = vector.broadcast %cst_60 : f32 to vector<2x192xf32>
    %208 = arith.mulf %207, %206 : vector<2x192xf32>
    %cst_61 = arith.constant 5.000000e-01 : f32
    %209 = vector.broadcast %cst_61 : f32 to vector<2x192xf32>
    %210 = arith.addf %208, %209 : vector<2x192xf32>
    %211 = vector.extract_strided_slice %210 {offsets = [0, 0], sizes = [2, 64], strides = [1, 1]} : vector<2x192xf32> to vector<2x64xf32>
    %212 = vector.extract_strided_slice %210 {offsets = [0, 64], sizes = [2, 64], strides = [1, 1]} : vector<2x192xf32> to vector<2x64xf32>
    %213 = vector.extract_strided_slice %210 {offsets = [0, 128], sizes = [2, 64], strides = [1, 1]} : vector<2x192xf32> to vector<2x64xf32>
    %214 = vector.extract_strided_slice %202 {offsets = [0, 192], sizes = [2, 64], strides = [1, 1]} : vector<2x256xf32> to vector<2x64xf32>
    %215 = math.tanh %214 : vector<2x64xf32>
    %216 = arith.mulf %212, %198 : vector<2x64xf32>
    %217 = arith.mulf %211, %215 : vector<2x64xf32>
    %218 = arith.addf %216, %217 : vector<2x64xf32>
    %219 = math.tanh %218 : vector<2x64xf32>
    %220 = arith.mulf %213, %219 : vector<2x64xf32>
    %221 = vector.extract_strided_slice %14 {offsets = [2, 0], sizes = [2, 256], strides = [1, 1]} : vector<16x256xf32> to vector<2x256xf32>
    %222 = arith.truncf %220 : vector<2x64xf32> to vector<2x64xbf16>
    %cst_62 = arith.constant dense<0.000000e+00> : vector<2x256xf32>
    %223 = tpu.matmul %222, %1, %cst_62 {dimension_numbers = #tpu.dot_dimension_numbers<[1], [0], [0], [1], [0, 0, 1, 1], [], []>} : vector<2x64xbf16>, vector<64x256xbf16>, vector<2x256xf32> -> vector<2x256xf32>
    %224 = arith.addf %221, %223 : vector<2x256xf32>
    %225 = vector.extract_strided_slice %224 {offsets = [0, 0], sizes = [2, 192], strides = [1, 1]} : vector<2x256xf32> to vector<2x192xf32>
    %cst_63 = arith.constant 5.000000e-01 : f32
    %226 = vector.broadcast %cst_63 : f32 to vector<2x192xf32>
    %227 = arith.mulf %226, %225 : vector<2x192xf32>
    %228 = math.tanh %227 : vector<2x192xf32>
    %cst_64 = arith.constant 5.000000e-01 : f32
    %229 = vector.broadcast %cst_64 : f32 to vector<2x192xf32>
    %230 = arith.mulf %229, %228 : vector<2x192xf32>
    %cst_65 = arith.constant 5.000000e-01 : f32
    %231 = vector.broadcast %cst_65 : f32 to vector<2x192xf32>
    %232 = arith.addf %230, %231 : vector<2x192xf32>
    %233 = vector.extract_strided_slice %232 {offsets = [0, 0], sizes = [2, 64], strides = [1, 1]} : vector<2x192xf32> to vector<2x64xf32>
    %234 = vector.extract_strided_slice %232 {offsets = [0, 64], sizes = [2, 64], strides = [1, 1]} : vector<2x192xf32> to vector<2x64xf32>
    %235 = vector.extract_strided_slice %232 {offsets = [0, 128], sizes = [2, 64], strides = [1, 1]} : vector<2x192xf32> to vector<2x64xf32>
    %236 = vector.extract_strided_slice %224 {offsets = [0, 192], sizes = [2, 64], strides = [1, 1]} : vector<2x256xf32> to vector<2x64xf32>
    %237 = math.tanh %236 : vector<2x64xf32>
    %238 = arith.mulf %234, %218 : vector<2x64xf32>
    %239 = arith.mulf %233, %237 : vector<2x64xf32>
    %240 = arith.addf %238, %239 : vector<2x64xf32>
    %241 = math.tanh %240 : vector<2x64xf32>
    %242 = arith.mulf %235, %241 : vector<2x64xf32>
    %243 = vector.extract_strided_slice %14 {offsets = [4, 0], sizes = [2, 256], strides = [1, 1]} : vector<16x256xf32> to vector<2x256xf32>
    %244 = arith.truncf %242 : vector<2x64xf32> to vector<2x64xbf16>
    %cst_66 = arith.constant dense<0.000000e+00> : vector<2x256xf32>
    %245 = tpu.matmul %244, %1, %cst_66 {dimension_numbers = #tpu.dot_dimension_numbers<[1], [0], [0], [1], [0, 0, 1, 1], [], []>} : vector<2x64xbf16>, vector<64x256xbf16>, vector<2x256xf32> -> vector<2x256xf32>
    %246 = arith.addf %243, %245 : vector<2x256xf32>
    %247 = vector.extract_strided_slice %246 {offsets = [0, 0], sizes = [2, 192], strides = [1, 1]} : vector<2x256xf32> to vector<2x192xf32>
    %cst_67 = arith.constant 5.000000e-01 : f32
    %248 = vector.broadcast %cst_67 : f32 to vector<2x192xf32>
    %249 = arith.mulf %248, %247 : vector<2x192xf32>
    %250 = math.tanh %249 : vector<2x192xf32>
    %cst_68 = arith.constant 5.000000e-01 : f32
    %251 = vector.broadcast %cst_68 : f32 to vector<2x192xf32>
    %252 = arith.mulf %251, %250 : vector<2x192xf32>
    %cst_69 = arith.constant 5.000000e-01 : f32
    %253 = vector.broadcast %cst_69 : f32 to vector<2x192xf32>
    %254 = arith.addf %252, %253 : vector<2x192xf32>
    %255 = vector.extract_strided_slice %254 {offsets = [0, 0], sizes = [2, 64], strides = [1, 1]} : vector<2x192xf32> to vector<2x64xf32>
    %256 = vector.extract_strided_slice %254 {offsets = [0, 64], sizes = [2, 64], strides = [1, 1]} : vector<2x192xf32> to vector<2x64xf32>
    %257 = vector.extract_strided_slice %254 {offsets = [0, 128], sizes = [2, 64], strides = [1, 1]} : vector<2x192xf32> to vector<2x64xf32>
    %258 = vector.extract_strided_slice %246 {offsets = [0, 192], sizes = [2, 64], strides = [1, 1]} : vector<2x256xf32> to vector<2x64xf32>
    %259 = math.tanh %258 : vector<2x64xf32>
    %260 = arith.mulf %256, %240 : vector<2x64xf32>
    %261 = arith.mulf %255, %259 : vector<2x64xf32>
    %262 = arith.addf %260, %261 : vector<2x64xf32>
    %263 = math.tanh %262 : vector<2x64xf32>
    %264 = arith.mulf %257, %263 : vector<2x64xf32>
    %265 = vector.extract_strided_slice %14 {offsets = [6, 0], sizes = [2, 256], strides = [1, 1]} : vector<16x256xf32> to vector<2x256xf32>
    %266 = arith.truncf %264 : vector<2x64xf32> to vector<2x64xbf16>
    %cst_70 = arith.constant dense<0.000000e+00> : vector<2x256xf32>
    %267 = tpu.matmul %266, %1, %cst_70 {dimension_numbers = #tpu.dot_dimension_numbers<[1], [0], [0], [1], [0, 0, 1, 1], [], []>} : vector<2x64xbf16>, vector<64x256xbf16>, vector<2x256xf32> -> vector<2x256xf32>
    %268 = arith.addf %265, %267 : vector<2x256xf32>
    %269 = vector.extract_strided_slice %268 {offsets = [0, 0], sizes = [2, 192], strides = [1, 1]} : vector<2x256xf32> to vector<2x192xf32>
    %cst_71 = arith.constant 5.000000e-01 : f32
    %270 = vector.broadcast %cst_71 : f32 to vector<2x192xf32>
    %271 = arith.mulf %270, %269 : vector<2x192xf32>
    %272 = math.tanh %271 : vector<2x192xf32>
    %cst_72 = arith.constant 5.000000e-01 : f32
    %273 = vector.broadcast %cst_72 : f32 to vector<2x192xf32>
    %274 = arith.mulf %273, %272 : vector<2x192xf32>
    %cst_73 = arith.constant 5.000000e-01 : f32
    %275 = vector.broadcast %cst_73 : f32 to vector<2x192xf32>
    %276 = arith.addf %274, %275 : vector<2x192xf32>
    %277 = vector.extract_strided_slice %276 {offsets = [0, 0], sizes = [2, 64], strides = [1, 1]} : vector<2x192xf32> to vector<2x64xf32>
    %278 = vector.extract_strided_slice %276 {offsets = [0, 64], sizes = [2, 64], strides = [1, 1]} : vector<2x192xf32> to vector<2x64xf32>
    %279 = vector.extract_strided_slice %276 {offsets = [0, 128], sizes = [2, 64], strides = [1, 1]} : vector<2x192xf32> to vector<2x64xf32>
    %280 = vector.extract_strided_slice %268 {offsets = [0, 192], sizes = [2, 64], strides = [1, 1]} : vector<2x256xf32> to vector<2x64xf32>
    %281 = math.tanh %280 : vector<2x64xf32>
    %282 = arith.mulf %278, %262 : vector<2x64xf32>
    %283 = arith.mulf %277, %281 : vector<2x64xf32>
    %284 = arith.addf %282, %283 : vector<2x64xf32>
    %285 = math.tanh %284 : vector<2x64xf32>
    %286 = arith.mulf %279, %285 : vector<2x64xf32>
    %287 = vector.extract_strided_slice %14 {offsets = [8, 0], sizes = [2, 256], strides = [1, 1]} : vector<16x256xf32> to vector<2x256xf32>
    %288 = arith.truncf %286 : vector<2x64xf32> to vector<2x64xbf16>
    %cst_74 = arith.constant dense<0.000000e+00> : vector<2x256xf32>
    %289 = tpu.matmul %288, %1, %cst_74 {dimension_numbers = #tpu.dot_dimension_numbers<[1], [0], [0], [1], [0, 0, 1, 1], [], []>} : vector<2x64xbf16>, vector<64x256xbf16>, vector<2x256xf32> -> vector<2x256xf32>
    %290 = arith.addf %287, %289 : vector<2x256xf32>
    %291 = vector.extract_strided_slice %290 {offsets = [0, 0], sizes = [2, 192], strides = [1, 1]} : vector<2x256xf32> to vector<2x192xf32>
    %cst_75 = arith.constant 5.000000e-01 : f32
    %292 = vector.broadcast %cst_75 : f32 to vector<2x192xf32>
    %293 = arith.mulf %292, %291 : vector<2x192xf32>
    %294 = math.tanh %293 : vector<2x192xf32>
    %cst_76 = arith.constant 5.000000e-01 : f32
    %295 = vector.broadcast %cst_76 : f32 to vector<2x192xf32>
    %296 = arith.mulf %295, %294 : vector<2x192xf32>
    %cst_77 = arith.constant 5.000000e-01 : f32
    %297 = vector.broadcast %cst_77 : f32 to vector<2x192xf32>
    %298 = arith.addf %296, %297 : vector<2x192xf32>
    %299 = vector.extract_strided_slice %298 {offsets = [0, 0], sizes = [2, 64], strides = [1, 1]} : vector<2x192xf32> to vector<2x64xf32>
    %300 = vector.extract_strided_slice %298 {offsets = [0, 64], sizes = [2, 64], strides = [1, 1]} : vector<2x192xf32> to vector<2x64xf32>
    %301 = vector.extract_strided_slice %298 {offsets = [0, 128], sizes = [2, 64], strides = [1, 1]} : vector<2x192xf32> to vector<2x64xf32>
    %302 = vector.extract_strided_slice %290 {offsets = [0, 192], sizes = [2, 64], strides = [1, 1]} : vector<2x256xf32> to vector<2x64xf32>
    %303 = math.tanh %302 : vector<2x64xf32>
    %304 = arith.mulf %300, %284 : vector<2x64xf32>
    %305 = arith.mulf %299, %303 : vector<2x64xf32>
    %306 = arith.addf %304, %305 : vector<2x64xf32>
    %307 = math.tanh %306 : vector<2x64xf32>
    %308 = arith.mulf %301, %307 : vector<2x64xf32>
    %309 = vector.extract_strided_slice %14 {offsets = [10, 0], sizes = [2, 256], strides = [1, 1]} : vector<16x256xf32> to vector<2x256xf32>
    %310 = arith.truncf %308 : vector<2x64xf32> to vector<2x64xbf16>
    %cst_78 = arith.constant dense<0.000000e+00> : vector<2x256xf32>
    %311 = tpu.matmul %310, %1, %cst_78 {dimension_numbers = #tpu.dot_dimension_numbers<[1], [0], [0], [1], [0, 0, 1, 1], [], []>} : vector<2x64xbf16>, vector<64x256xbf16>, vector<2x256xf32> -> vector<2x256xf32>
    %312 = arith.addf %309, %311 : vector<2x256xf32>
    %313 = vector.extract_strided_slice %312 {offsets = [0, 0], sizes = [2, 192], strides = [1, 1]} : vector<2x256xf32> to vector<2x192xf32>
    %cst_79 = arith.constant 5.000000e-01 : f32
    %314 = vector.broadcast %cst_79 : f32 to vector<2x192xf32>
    %315 = arith.mulf %314, %313 : vector<2x192xf32>
    %316 = math.tanh %315 : vector<2x192xf32>
    %cst_80 = arith.constant 5.000000e-01 : f32
    %317 = vector.broadcast %cst_80 : f32 to vector<2x192xf32>
    %318 = arith.mulf %317, %316 : vector<2x192xf32>
    %cst_81 = arith.constant 5.000000e-01 : f32
    %319 = vector.broadcast %cst_81 : f32 to vector<2x192xf32>
    %320 = arith.addf %318, %319 : vector<2x192xf32>
    %321 = vector.extract_strided_slice %320 {offsets = [0, 0], sizes = [2, 64], strides = [1, 1]} : vector<2x192xf32> to vector<2x64xf32>
    %322 = vector.extract_strided_slice %320 {offsets = [0, 64], sizes = [2, 64], strides = [1, 1]} : vector<2x192xf32> to vector<2x64xf32>
    %323 = vector.extract_strided_slice %320 {offsets = [0, 128], sizes = [2, 64], strides = [1, 1]} : vector<2x192xf32> to vector<2x64xf32>
    %324 = vector.extract_strided_slice %312 {offsets = [0, 192], sizes = [2, 64], strides = [1, 1]} : vector<2x256xf32> to vector<2x64xf32>
    %325 = math.tanh %324 : vector<2x64xf32>
    %326 = arith.mulf %322, %306 : vector<2x64xf32>
    %327 = arith.mulf %321, %325 : vector<2x64xf32>
    %328 = arith.addf %326, %327 : vector<2x64xf32>
    %329 = math.tanh %328 : vector<2x64xf32>
    %330 = arith.mulf %323, %329 : vector<2x64xf32>
    %331 = vector.extract_strided_slice %14 {offsets = [12, 0], sizes = [2, 256], strides = [1, 1]} : vector<16x256xf32> to vector<2x256xf32>
    %332 = arith.truncf %330 : vector<2x64xf32> to vector<2x64xbf16>
    %cst_82 = arith.constant dense<0.000000e+00> : vector<2x256xf32>
    %333 = tpu.matmul %332, %1, %cst_82 {dimension_numbers = #tpu.dot_dimension_numbers<[1], [0], [0], [1], [0, 0, 1, 1], [], []>} : vector<2x64xbf16>, vector<64x256xbf16>, vector<2x256xf32> -> vector<2x256xf32>
    %334 = arith.addf %331, %333 : vector<2x256xf32>
    %335 = vector.extract_strided_slice %334 {offsets = [0, 0], sizes = [2, 192], strides = [1, 1]} : vector<2x256xf32> to vector<2x192xf32>
    %cst_83 = arith.constant 5.000000e-01 : f32
    %336 = vector.broadcast %cst_83 : f32 to vector<2x192xf32>
    %337 = arith.mulf %336, %335 : vector<2x192xf32>
    %338 = math.tanh %337 : vector<2x192xf32>
    %cst_84 = arith.constant 5.000000e-01 : f32
    %339 = vector.broadcast %cst_84 : f32 to vector<2x192xf32>
    %340 = arith.mulf %339, %338 : vector<2x192xf32>
    %cst_85 = arith.constant 5.000000e-01 : f32
    %341 = vector.broadcast %cst_85 : f32 to vector<2x192xf32>
    %342 = arith.addf %340, %341 : vector<2x192xf32>
    %343 = vector.extract_strided_slice %342 {offsets = [0, 0], sizes = [2, 64], strides = [1, 1]} : vector<2x192xf32> to vector<2x64xf32>
    %344 = vector.extract_strided_slice %342 {offsets = [0, 64], sizes = [2, 64], strides = [1, 1]} : vector<2x192xf32> to vector<2x64xf32>
    %345 = vector.extract_strided_slice %342 {offsets = [0, 128], sizes = [2, 64], strides = [1, 1]} : vector<2x192xf32> to vector<2x64xf32>
    %346 = vector.extract_strided_slice %334 {offsets = [0, 192], sizes = [2, 64], strides = [1, 1]} : vector<2x256xf32> to vector<2x64xf32>
    %347 = math.tanh %346 : vector<2x64xf32>
    %348 = arith.mulf %344, %328 : vector<2x64xf32>
    %349 = arith.mulf %343, %347 : vector<2x64xf32>
    %350 = arith.addf %348, %349 : vector<2x64xf32>
    %351 = math.tanh %350 : vector<2x64xf32>
    %352 = arith.mulf %345, %351 : vector<2x64xf32>
    %353 = vector.extract_strided_slice %14 {offsets = [14, 0], sizes = [2, 256], strides = [1, 1]} : vector<16x256xf32> to vector<2x256xf32>
    %354 = arith.truncf %352 : vector<2x64xf32> to vector<2x64xbf16>
    %cst_86 = arith.constant dense<0.000000e+00> : vector<2x256xf32>
    %355 = tpu.matmul %354, %1, %cst_86 {dimension_numbers = #tpu.dot_dimension_numbers<[1], [0], [0], [1], [0, 0, 1, 1], [], []>} : vector<2x64xbf16>, vector<64x256xbf16>, vector<2x256xf32> -> vector<2x256xf32>
    %356 = arith.addf %353, %355 : vector<2x256xf32>
    %357 = vector.extract_strided_slice %356 {offsets = [0, 0], sizes = [2, 192], strides = [1, 1]} : vector<2x256xf32> to vector<2x192xf32>
    %cst_87 = arith.constant 5.000000e-01 : f32
    %358 = vector.broadcast %cst_87 : f32 to vector<2x192xf32>
    %359 = arith.mulf %358, %357 : vector<2x192xf32>
    %360 = math.tanh %359 : vector<2x192xf32>
    %cst_88 = arith.constant 5.000000e-01 : f32
    %361 = vector.broadcast %cst_88 : f32 to vector<2x192xf32>
    %362 = arith.mulf %361, %360 : vector<2x192xf32>
    %cst_89 = arith.constant 5.000000e-01 : f32
    %363 = vector.broadcast %cst_89 : f32 to vector<2x192xf32>
    %364 = arith.addf %362, %363 : vector<2x192xf32>
    %365 = vector.extract_strided_slice %364 {offsets = [0, 0], sizes = [2, 64], strides = [1, 1]} : vector<2x192xf32> to vector<2x64xf32>
    %366 = vector.extract_strided_slice %364 {offsets = [0, 64], sizes = [2, 64], strides = [1, 1]} : vector<2x192xf32> to vector<2x64xf32>
    %367 = vector.extract_strided_slice %364 {offsets = [0, 128], sizes = [2, 64], strides = [1, 1]} : vector<2x192xf32> to vector<2x64xf32>
    %368 = vector.extract_strided_slice %356 {offsets = [0, 192], sizes = [2, 64], strides = [1, 1]} : vector<2x256xf32> to vector<2x64xf32>
    %369 = math.tanh %368 : vector<2x64xf32>
    %370 = arith.mulf %366, %350 : vector<2x64xf32>
    %371 = arith.mulf %365, %369 : vector<2x64xf32>
    %372 = arith.addf %370, %371 : vector<2x64xf32>
    %373 = math.tanh %372 : vector<2x64xf32>
    %374 = arith.mulf %367, %373 : vector<2x64xf32>
    %375 = tpu.concatenate %220, %242, %264, %286, %308, %330, %352, %374 in 0 : vector<2x64xf32>, vector<2x64xf32>, vector<2x64xf32>, vector<2x64xf32>, vector<2x64xf32>, vector<2x64xf32>, vector<2x64xf32>, vector<2x64xf32> -> vector<16x64xf32>
    %c0_90 = arith.constant 0 : index
    %c0_91 = arith.constant 0 : index
    %376 = vector.load %arg4[%c0_90, %c0_91] : memref<2x16xf32, #tpu.memory_space<vmem>>, vector<2x16xf32>
    %cst_92 = arith.constant dense<0.000000e+00> : vector<2x64xf32>
    %377 = tpu.matmul %376, %375, %cst_92 {dimension_numbers = #tpu.dot_dimension_numbers<[1], [0], [0], [1], [0, 0, 1, 1], [], []>} : vector<2x16xf32>, vector<16x64xf32>, vector<2x64xf32> -> vector<2x64xf32>
    %378 = arith.truncf %377 : vector<2x64xf32> to vector<2x64xbf16>
    %c0_93 = arith.constant 0 : index
    %c0_94 = arith.constant 0 : index
    %379 = vector.load %arg14[%c0_93, %c0_94] : memref<64x64xbf16, #tpu.memory_space<vmem>>, vector<64x64xbf16>
    %cst_95 = arith.constant dense<0.000000e+00> : vector<2x64xf32>
    %380 = tpu.matmul %378, %379, %cst_95 {dimension_numbers = #tpu.dot_dimension_numbers<[1], [0], [0], [1], [0, 0, 1, 1], [], []>} : vector<2x64xbf16>, vector<64x64xbf16>, vector<2x64xf32> -> vector<2x64xf32>
    %381 = tpu.concatenate %380, %380, %380, %380, %380, %380, %380, %380 in 0 : vector<2x64xf32>, vector<2x64xf32>, vector<2x64xf32>, vector<2x64xf32>, vector<2x64xf32>, vector<2x64xf32>, vector<2x64xf32>, vector<2x64xf32> -> vector<16x64xf32>
    %382 = arith.truncf %193 : vector<16x64xf32> to vector<16x64xbf16>
    %c0_96 = arith.constant 0 : index
    %c0_97 = arith.constant 0 : index
    %383 = vector.load %arg13[%c0_96, %c0_97] : memref<64x64xbf16, #tpu.memory_space<vmem>>, vector<64x64xbf16>
    %cst_98 = arith.constant dense<0.000000e+00> : vector<16x64xf32>
    %384 = tpu.matmul %382, %383, %cst_98 {dimension_numbers = #tpu.dot_dimension_numbers<[1], [0], [0], [1], [0, 0, 1, 1], [], []>} : vector<16x64xbf16>, vector<64x64xbf16>, vector<16x64xf32> -> vector<16x64xf32>
    %385 = arith.addf %384, %381 : vector<16x64xf32>
    %386 = math.tanh %385 : vector<16x64xf32>
    %387 = arith.truncf %386 : vector<16x64xf32> to vector<16x64xbf16>
    %c0_99 = arith.constant 0 : index
    %c0_100 = arith.constant 0 : index
    %388 = vector.load %arg15[%c0_99, %c0_100] : memref<64x1xbf16, #tpu.memory_space<vmem>>, vector<64x1xbf16>
    %cst_101 = arith.constant dense<0.000000e+00> : vector<16x1xf32>
    %389 = tpu.matmul %387, %388, %cst_101 {dimension_numbers = #tpu.dot_dimension_numbers<[1], [0], [0], [1], [0, 0, 1, 1], [], []>} : vector<16x64xbf16>, vector<64x1xbf16>, vector<16x1xf32> -> vector<16x1xf32>
    %c0_102 = arith.constant 0 : index
    %c0_103 = arith.constant 0 : index
    %390 = vector.load %arg6[%c0_102, %c0_103] : memref<16x1xf32, #tpu.memory_space<vmem>>, vector<16x1xf32>
    %391 = arith.mulf %390, %389 : vector<16x1xf32>
    %cst_104 = arith.constant 1.000000e+00 : f32
    %392 = vector.broadcast %cst_104 : f32 to vector<16x1xf32>
    %393 = arith.subf %392, %390 : vector<16x1xf32>
    %cst_105 = arith.constant 9.99999995E+11 : f32
    %394 = vector.broadcast %cst_105 : f32 to vector<16x1xf32>
    %395 = arith.mulf %393, %394 : vector<16x1xf32>
    %396 = arith.subf %391, %395 : vector<16x1xf32>
    %cst_106 = arith.constant dense<0xFF800000> : vector<1xf32>
    %397 = vector.multi_reduction <maximumf>, %396, %cst_106 [0] : vector<16x1xf32> to vector<1xf32>
    %398 = vector.shape_cast %397 : vector<1xf32> to vector<1x1xf32>
    %399 = vector.broadcast %398 : vector<1x1xf32> to vector<16x1xf32>
    %400 = arith.subf %396, %399 : vector<16x1xf32>
    %401 = math.exp %400 : vector<16x1xf32>
    %cst_107 = arith.constant dense<0.000000e+00> : vector<2x1xf32>
    %402 = tpu.matmul %2, %401, %cst_107 {dimension_numbers = #tpu.dot_dimension_numbers<[1], [0], [0], [1], [0, 0, 1, 1], [], []>} : vector<2x16xf32>, vector<16x1xf32>, vector<2x1xf32> -> vector<2x1xf32>
    %403 = tpu.reciprocal %402 {approx = true} : vector<2x1xf32> -> vector<2x1xf32>
    %404 = tpu.concatenate %403, %403, %403, %403, %403, %403, %403, %403 in 0 : vector<2x1xf32>, vector<2x1xf32>, vector<2x1xf32>, vector<2x1xf32>, vector<2x1xf32>, vector<2x1xf32>, vector<2x1xf32>, vector<2x1xf32> -> vector<16x1xf32>
    %405 = arith.mulf %401, %404 : vector<16x1xf32>
    %406 = vector.broadcast %405 : vector<16x1xf32> to vector<16x64xf32>
    %407 = arith.mulf %406, %193 : vector<16x64xf32>
    %cst_108 = arith.constant dense<0.000000e+00> : vector<2x64xf32>
    %408 = tpu.matmul %2, %407, %cst_108 {dimension_numbers = #tpu.dot_dimension_numbers<[1], [0], [0], [1], [0, 0, 1, 1], [], []>} : vector<2x16xf32>, vector<16x64xf32>, vector<2x64xf32> -> vector<2x64xf32>
    %409 = tpu.concatenate %408, %377 in 1 : vector<2x64xf32>, vector<2x64xf32> -> vector<2x128xf32>
    %410 = arith.truncf %409 : vector<2x128xf32> to vector<2x128xbf16>
    %c0_109 = arith.constant 0 : index
    %c0_110 = arith.constant 0 : index
    %411 = vector.load %arg16[%c0_109, %c0_110] : memref<128x64xbf16, #tpu.memory_space<vmem>>, vector<128x64xbf16>
    %cst_111 = arith.constant dense<0.000000e+00> : vector<2x64xf32>
    %412 = tpu.matmul %410, %411, %cst_111 {dimension_numbers = #tpu.dot_dimension_numbers<[1], [0], [0], [1], [0, 0, 1, 1], [], []>} : vector<2x128xbf16>, vector<128x64xbf16>, vector<2x64xf32> -> vector<2x64xf32>
    %413 = math.tanh %412 : vector<2x64xf32>
    %414 = arith.truncf %413 : vector<2x64xf32> to vector<2x64xbf16>
    %c0_112 = arith.constant 0 : index
    %c0_113 = arith.constant 0 : index
    %415 = vector.load %arg17[%c0_112, %c0_113] : memref<64x128xbf16, #tpu.memory_space<vmem>>, vector<64x128xbf16>
    %cst_114 = arith.constant dense<0.000000e+00> : vector<2x128xf32>
    %416 = tpu.matmul %414, %415, %cst_114 {dimension_numbers = #tpu.dot_dimension_numbers<[1], [0], [0], [1], [0, 0, 1, 1], [], []>} : vector<2x64xbf16>, vector<64x128xbf16>, vector<2x128xf32> -> vector<2x128xf32>
    %c0_115 = arith.constant 0 : index
    %c0_116 = arith.constant 0 : index
    %417 = vector.load %arg18[%c0_115, %c0_116] : memref<1x128xf32, #tpu.memory_space<vmem>>, vector<1x128xf32>
    %418 = vector.broadcast %417 : vector<1x128xf32> to vector<2x128xf32>
    %419 = arith.addf %416, %418 : vector<2x128xf32>
    %420 = math.tanh %419 : vector<2x128xf32>
    %421 = arith.truncf %420 : vector<2x128xf32> to vector<2x128xbf16>
    %c0_117 = arith.constant 0 : index
    %c0_118 = arith.constant 0 : index
    %422 = vector.load %arg19[%c0_117, %c0_118] : memref<128x4xbf16, #tpu.memory_space<vmem>>, vector<128x4xbf16>
    %cst_119 = arith.constant dense<0.000000e+00> : vector<2x4xf32>
    %423 = tpu.matmul %421, %422, %cst_119 {dimension_numbers = #tpu.dot_dimension_numbers<[1], [0], [0], [1], [0, 0, 1, 1], [], []>} : vector<2x128xbf16>, vector<128x4xbf16>, vector<2x4xf32> -> vector<2x4xf32>
    %c0_120 = arith.constant 0 : index
    %c0_121 = arith.constant 0 : index
    %424 = vector.load %arg20[%c0_120, %c0_121] : memref<1x4xf32, #tpu.memory_space<vmem>>, vector<1x4xf32>
    %425 = vector.broadcast %424 : vector<1x4xf32> to vector<2x4xf32>
    %426 = arith.addf %423, %425 : vector<2x4xf32>
    %c0_122 = arith.constant 0 : index
    %c0_123 = arith.constant 0 : index
    %427 = vector.load %arg21[%c0_122, %c0_123] : memref<2x4xf32, #tpu.memory_space<vmem>>, vector<2x4xf32>
    tpu.vector_store %arg21[%c0_122, %c0_123], %426 {strides = array<i32>} : memref<2x4xf32, #tpu.memory_space<vmem>>, vector<2x4xf32>,
    return
  }
  func.func @transform_0(%arg0: i32) -> (i32, i32) {
    %c0_i32 = arith.constant 0 : i32
    %c0_i32_0 = arith.constant 0 : i32
    %c0_i32_1 = arith.constant 0 : i32
    return %c0_i32, %c0_i32_0 : i32, i32
  }
  func.func @transform_1(%arg0: i32) -> (i32, i32) {
    %c0_i32 = arith.constant 0 : i32
    %c0_i32_0 = arith.constant 0 : i32
    %c0_i32_1 = arith.constant 0 : i32
    return %c0_i32, %c0_i32_0 : i32, i32
  }
  func.func @transform_2(%arg0: i32) -> (i32, i32) {
    %c0_i32 = arith.constant 0 : i32
    %c0_i32_0 = arith.constant 0 : i32
    %c0_i32_1 = arith.constant 0 : i32
    return %c0_i32, %c0_i32_0 : i32, i32
  }
  func.func @transform_3(%arg0: i32) -> (i32, i32) {
    %c0_i32 = arith.constant 0 : i32
    %c0_i32_0 = arith.constant 0 : i32
    %c0_i32_1 = arith.constant 0 : i32
    return %c0_i32, %c0_i32_0 : i32, i32
  }
  func.func @transform_4(%arg0: i32) -> (i32, i32) {
    %c0_i32 = arith.constant 0 : i32
    %c0_i32_0 = arith.constant 0 : i32
    %c0_i32_1 = arith.constant 0 : i32
    return %c0_i32, %c0_i32_0 : i32, i32
  }
  func.func @transform_5(%arg0: i32) -> (i32, i32) {
    %c0_i32 = arith.constant 0 : i32
    %c0_i32_0 = arith.constant 0 : i32
    %c0_i32_1 = arith.constant 0 : i32
    return %c0_i32, %c0_i32_0 : i32, i32
  }
  func.func @transform_6(%arg0: i32) -> (i32, i32) {
    %c0_i32 = arith.constant 0 : i32
    %c0_i32_0 = arith.constant 0 : i32
    %c0_i32_1 = arith.constant 0 : i32
    return %c0_i32, %c0_i32_0 : i32, i32
  }
  func.func @transform_7(%arg0: i32) -> (i32, i32) {
    %c0_i32 = arith.constant 0 : i32
    %c0_i32_0 = arith.constant 0 : i32
    %c0_i32_1 = arith.constant 0 : i32
    return %c0_i32, %c0_i32_0 : i32, i32
  }
  func.func @transform_8(%arg0: i32) -> (i32, i32) {
    %c0_i32 = arith.constant 0 : i32
    %c0_i32_0 = arith.constant 0 : i32
    %c0_i32_1 = arith.constant 0 : i32
    return %c0_i32, %c0_i32_0 : i32, i32
  }
  func.func @transform_9(%arg0: i32) -> (i32, i32) {
    %c0_i32 = arith.constant 0 : i32
    %c0_i32_0 = arith.constant 0 : i32
    %c0_i32_1 = arith.constant 0 : i32
    return %c0_i32, %c0_i32_0 : i32, i32
  }
  func.func @transform_10(%arg0: i32) -> (i32, i32) {
    %c0_i32 = arith.constant 0 : i32
    %c0_i32_0 = arith.constant 0 : i32
    %c0_i32_1 = arith.constant 0 : i32
    return %c0_i32, %c0_i32_0 : i32, i32
  }
  func.func @transform_11(%arg0: i32) -> (i32, i32) {
    %c0_i32 = arith.constant 0 : i32
    %c0_i32_0 = arith.constant 0 : i32
    %c0_i32_1 = arith.constant 0 : i32
    return %c0_i32, %c0_i32_0 : i32, i32
  }
  func.func @transform_12(%arg0: i32) -> (i32, i32) {
    %c0_i32 = arith.constant 0 : i32
    %c0_i32_0 = arith.constant 0 : i32
    %c0_i32_1 = arith.constant 0 : i32
    return %c0_i32, %c0_i32_0 : i32, i32
  }
  func.func @transform_13(%arg0: i32) -> (i32, i32) {
    %c0_i32 = arith.constant 0 : i32
    %c0_i32_0 = arith.constant 0 : i32
    %c0_i32_1 = arith.constant 0 : i32
    return %c0_i32, %c0_i32_0 : i32, i32
  }
  func.func @transform_14(%arg0: i32) -> (i32, i32) {
    %c0_i32 = arith.constant 0 : i32
    %c0_i32_0 = arith.constant 0 : i32
    %c0_i32_1 = arith.constant 0 : i32
    return %c0_i32, %c0_i32_0 : i32, i32
  }
  func.func @transform_15(%arg0: i32) -> (i32, i32) {
    %c0_i32 = arith.constant 0 : i32
    %c0_i32_0 = arith.constant 0 : i32
    %c0_i32_1 = arith.constant 0 : i32
    return %c0_i32, %c0_i32_0 : i32, i32
  }
  func.func @transform_16(%arg0: i32) -> (i32, i32) {
    %c0_i32 = arith.constant 0 : i32
    %c0_i32_0 = arith.constant 0 : i32
    %c0_i32_1 = arith.constant 0 : i32
    return %c0_i32, %c0_i32_0 : i32, i32
  }
  func.func @transform_17(%arg0: i32) -> (i32, i32) {
    %c0_i32 = arith.constant 0 : i32
    %c0_i32_0 = arith.constant 0 : i32
    %c0_i32_1 = arith.constant 0 : i32
    return %c0_i32, %c0_i32_0 : i32, i32
  }
  func.func @transform_18(%arg0: i32) -> (i32, i32) {
    %c0_i32 = arith.constant 0 : i32
    %c0_i32_0 = arith.constant 0 : i32
    %c0_i32_1 = arith.constant 0 : i32
    return %c0_i32, %c0_i32_0 : i32, i32
  }
  func.func @transform_19(%arg0: i32) -> (i32, i32) {
    %c0_i32 = arith.constant 0 : i32
    %c0_i32_0 = arith.constant 0 : i32
    %c0_i32_1 = arith.constant 0 : i32
    return %c0_i32, %c0_i32_0 : i32, i32
  }
  func.func @transform_20(%arg0: i32) -> (i32, i32) {
    %c0_i32 = arith.constant 0 : i32
    %c0_i32_0 = arith.constant 0 : i32
    %c0_i32_1 = arith.constant 0 : i32
    return %c0_i32, %c0_i32_0 : i32, i32
  }
}

</mosaic_0001>

<llo_original>
// kernel: tpu_custom_call.1
$region0: #{tpu_custom_call.1}
  #allocation0 [shape = 'u32[]', space=smem, size = 0x4, offset = 0x4, fixed_abs, tag = 'smem constant byte address 0x4 - core index']
  #allocation1 [shape = 'u32[72,128]{1,0:T(1,128)}', space=vmem, size = 0x9000, scoped, tag = 'internal scratch']
  %s0 = inlined_call_operand.vmem [shape: bf16[16,50], index: 0, kind: input, shape index: {}]
  %s1 = inlined_call_operand.hbm [shape: bf16[16,50], index: 1, kind: input, shape index: {}]
  %s2 = inlined_call_operand.hbm [shape: f32[2,16], index: 2, kind: input, shape index: {}]
  %s3 = inlined_call_operand.hbm [shape: f32[2,16], index: 3, kind: input, shape index: {}]
  %s4 = inlined_call_operand.hbm [shape: f32[2,16], index: 4, kind: input, shape index: {}]
  %s5 = inlined_call_operand.vmem [shape: f32[16,1], index: 5, kind: input, shape index: {}]
  %s6 = inlined_call_operand.vmem [shape: bf16[50,256], index: 6, kind: input, shape index: {}]
  %s7 = inlined_call_operand.vmem [shape: bf16[64,256], index: 7, kind: input, shape index: {}]
  %s8 = inlined_call_operand.hbm [shape: f32[1,256], index: 8, kind: input, shape index: {}]
  %s9 = inlined_call_operand.hbm [shape: bf16[50,256], index: 9, kind: input, shape index: {}]
  %s10 = inlined_call_operand.vmem [shape: bf16[64,256], index: 10, kind: input, shape index: {}]
  %s11 = inlined_call_operand.hbm [shape: f32[1,256], index: 11, kind: input, shape index: {}]
  %s12 = inlined_call_operand.hbm [shape: bf16[64,64], index: 12, kind: input, shape index: {}]
  %s13 = inlined_call_operand.hbm [shape: bf16[64,64], index: 13, kind: input, shape index: {}]
  %s14 = inlined_call_operand.vmem [shape: bf16[64,1], index: 14, kind: input, shape index: {}]
  %s15 = inlined_call_operand.vmem [shape: bf16[128,64], index: 15, kind: input, shape index: {}]
  %s16 = inlined_call_operand.hbm [shape: bf16[64,128], index: 16, kind: input, shape index: {}]
  %s17 = inlined_call_operand.hbm [shape: f32[1,128], index: 17, kind: input, shape index: {}]
  %s18 = inlined_call_operand.vmem [shape: bf16[128,4], index: 18, kind: input, shape index: {}]
  %s19 = inlined_call_operand.vmem [shape: f32[1,4], index: 19, kind: input, shape index: {}]
  %s20 = inlined_call_operand.hbm [shape: f32[2,4], index: 20, kind: output, shape index: {}]
  %s21 = sld [smem:[#allocation0]]
  $region134: #{tpu_custom_call.1} parent=0
    _
  %s23 = ssub.s32 1, %s21
  %s24 = scalar_select 0, %s23, %s21
  $region1: #{tpu_custom_call.1} parent=0
    #allocation2 [shape = 'u8[4096]{0}', space=vmem, size = 0x1000, scoped, tag = 'input window, operand 1, single buffered']
    #allocation3 [shape = 's32[1]{0}', space=sflag, size = 0x4, scoped, tag = 'scoped memory for tpu_custom_call.1']
    #allocation4 [shape = 's32[1]{0}', space=sflag, size = 0x4, scoped, tag = 'scoped memory for tpu_custom_call.1']
    #allocation5 [shape = 'u8[1024]{0}', space=vmem, size = 0x400, scoped, tag = 'input window, operand 2, single buffered']
    #allocation6 [shape = 's32[1]{0}', space=sflag, size = 0x4, scoped, tag = 'scoped memory for tpu_custom_call.1']
    #allocation7 [shape = 'u8[1024]{0}', space=vmem, size = 0x400, scoped, tag = 'input window, operand 3, single buffered']
    #allocation8 [shape = 'u8[1024]{0}', space=vmem, size = 0x400, scoped, tag = 'input window, operand 4, single buffered']
    #allocation9 [shape = 's32[1]{0}', space=sflag, size = 0x4, scoped, tag = 'scoped memory for tpu_custom_call.1']
    #allocation10 [shape = 'u8[1024]{0}', space=vmem, size = 0x400, scoped, tag = 'input window, operand 8, single buffered']
    #allocation11 [shape = 'u8[28672]{0}', space=vmem, size = 0x7000, scoped, tag = 'input window, operand 9, single buffered']
    #allocation12 [shape = 's32[1]{0}', space=sflag, size = 0x4, scoped, tag = 'scoped memory for tpu_custom_call.1']
    #allocation13 [shape = 'u8[1024]{0}', space=vmem, size = 0x400, scoped, tag = 'input window, operand 11, single buffered']
    #allocation14 [shape = 'u8[16384]{0}', space=vmem, size = 0x4000, scoped, tag = 'input window, operand 12, single buffered']
    #allocation15 [shape = 's32[1]{0}', space=sflag, size = 0x4, scoped, tag = 'scoped memory for tpu_custom_call.1']
    #allocation16 [shape = 'u8[16384]{0}', space=vmem, size = 0x4000, scoped, tag = 'input window, operand 13, single buffered']
    #allocation17 [shape = 'u8[16384]{0}', space=vmem, size = 0x4000, scoped, tag = 'input window, operand 16, single buffered']
    #allocation18 [shape = 's32[1]{0}', space=sflag, size = 0x4, scoped, tag = 'scoped memory for tpu_custom_call.1']
    #allocation19 [shape = 'u8[512]{0}', space=vmem, size = 0x400, scoped, tag = 'input window, operand 17, single buffered']
    #allocation20 [shape = 'u8[1024]{0}', space=vmem, size = 0x400, scoped, tag = 'output window, operand 0, single buffered']
    %25 = vsyncpa [#allocation3], 0
    %26 = vsyncpa [#allocation6], 0
    %27 = vsyncpa [#allocation9], 0
    %28 = vsyncpa [#allocation12], 0
    %29 = vsyncpa [#allocation15], 0
    %30 = vsyncpa [#allocation18], 0
    %31 = vsyncpa [#allocation4], 0
    // Predicated region
    $region2: #{tpu_custom_call.1} parent=1 // pred_check
      _
    $region3: #{tpu_custom_call.1} parent=1 // pred_check_branch
      %33 = sbr.rel (0) target = $region5
    $region4: #{tpu_custom_call.1} parent=1 // pred_region
      _
    $region5: #{tpu_custom_call.1} parent=1 // pred_fallthru
      _
    // Predicated region
    $region6: #{tpu_custom_call.1} parent=1 // pred_check
      _
    $region7: #{tpu_custom_call.1} parent=1 // pred_check_branch
      %35 = sbr.rel (0) target = $region9
    $region8: #{tpu_custom_call.1} parent=1 // pred_region
      %37 = vsyncadd [#allocation3], 0
      %s38 = sshll.u32 %s1, 4
      %s39 = int_to_ptr.hbm [resolvable:$true] %s38
      %s40 = sshll.u32 [#allocation2], 4
      %s41 = int_to_ptr.vmem [resolvable:$true] %s40
      %46 = dma.hbm_to_vmem [thread:$0]  %s39, 128, %s41, [#allocation3], 64, 64, 4
    $region9: #{tpu_custom_call.1} parent=1 // pred_fallthru
      _
    // Predicated region
    $region10: #{tpu_custom_call.1} parent=1 // pred_check
      _
    $region11: #{tpu_custom_call.1} parent=1 // pred_check_branch
      %48 = sbr.rel (0) target = $region13
    $region12: #{tpu_custom_call.1} parent=1 // pred_region
      %50 = vsyncadd [#allocation6], 0
      %s52 = sshll.u32 %s2, 4
      %s53 = int_to_ptr.hbm [resolvable:$true] %s52
      %s54 = sshll.u32 [#allocation5], 4
      %s55 = int_to_ptr.vmem [resolvable:$true] %s54
      %57 = dma.hbm_to_vmem [thread:$0]  %s53, 32, %s55, [#allocation6]
    $region13: #{tpu_custom_call.1} parent=1 // pred_fallthru
      _
    // Predicated region
    $region14: #{tpu_custom_call.1} parent=1 // pred_check
      _
    $region15: #{tpu_custom_call.1} parent=1 // pred_check_branch
      %59 = sbr.rel (0) target = $region17
    $region16: #{tpu_custom_call.1} parent=1 // pred_region
      %61 = vsyncadd [#allocation6], 0
      %s63 = sshll.u32 %s3, 4
      %s64 = int_to_ptr.hbm [resolvable:$true] %s63
      %s65 = sshll.u32 [#allocation7], 4
      %s66 = int_to_ptr.vmem [resolvable:$true] %s65
      %68 = dma.hbm_to_vmem [thread:$0]  %s64, 32, %s66, [#allocation6]
    $region17: #{tpu_custom_call.1} parent=1 // pred_fallthru
      _
    // Predicated region
    $region18: #{tpu_custom_call.1} parent=1 // pred_check
      _
    $region19: #{tpu_custom_call.1} parent=1 // pred_check_branch
      %70 = sbr.rel (0) target = $region21
    $region20: #{tpu_custom_call.1} parent=1 // pred_region
      %72 = vsyncadd [#allocation9], 0
      %s74 = sshll.u32 %s4, 4
      %s75 = int_to_ptr.hbm [resolvable:$true] %s74
      %s76 = sshll.u32 [#allocation8], 4
      %s77 = int_to_ptr.vmem [resolvable:$true] %s76
      %79 = dma.hbm_to_vmem [thread:$0]  %s75, 32, %s77, [#allocation9]
    $region21: #{tpu_custom_call.1} parent=1 // pred_fallthru
      _
    // Predicated region
    $region22: #{tpu_custom_call.1} parent=1 // pred_check
      _
    $region23: #{tpu_custom_call.1} parent=1 // pred_check_branch
      %81 = sbr.rel (0) target = $region25
    $region24: #{tpu_custom_call.1} parent=1 // pred_region
      _
    $region25: #{tpu_custom_call.1} parent=1 // pred_fallthru
      _
    // Predicated region
    $region26: #{tpu_custom_call.1} parent=1 // pred_check
      _
    $region27: #{tpu_custom_call.1} parent=1 // pred_check_branch
      %83 = sbr.rel (0) target = $region29
    $region28: #{tpu_custom_call.1} parent=1 // pred_region
      _
    $region29: #{tpu_custom_call.1} parent=1 // pred_fallthru
      _
    // Predicated region
    $region30: #{tpu_custom_call.1} parent=1 // pred_check
      _
    $region31: #{tpu_custom_call.1} parent=1 // pred_check_branch
      %85 = sbr.rel (0) target = $region33
    $region32: #{tpu_custom_call.1} parent=1 // pred_region
      _
    $region33: #{tpu_custom_call.1} parent=1 // pred_fallthru
      _
    // Predicated region
    $region34: #{tpu_custom_call.1} parent=1 // pred_check
      _
    $region35: #{tpu_custom_call.1} parent=1 // pred_check_branch
      %87 = sbr.rel (0) target = $region37
    $region36: #{tpu_custom_call.1} parent=1 // pred_region
      %89 = vsyncadd [#allocation9], 0
      %s91 = sshll.u32 %s8, 4
      %s92 = int_to_ptr.hbm [resolvable:$true] %s91
      %s93 = sshll.u32 [#allocation10], 4
      %s94 = int_to_ptr.vmem [resolvable:$true] %s93
      %96 = dma.hbm_to_vmem [thread:$0]  %s92, 32, %s94, [#allocation9]
    $region37: #{tpu_custom_call.1} parent=1 // pred_fallthru
      _
    // Predicated region
    $region38: #{tpu_custom_call.1} parent=1 // pred_check
      _
    $region39: #{tpu_custom_call.1} parent=1 // pred_check_branch
      %98 = sbr.rel (0) target = $region41
    $region40: #{tpu_custom_call.1} parent=1 // pred_region
      %100 = vsyncadd [#allocation12], 0
      %s101 = sshll.u32 %s9, 4
      %s102 = int_to_ptr.hbm [resolvable:$true] %s101
      %s103 = sshll.u32 [#allocation11], 4
      %s104 = int_to_ptr.vmem [resolvable:$true] %s103
      %109 = dma.hbm_to_vmem [thread:$0]  %s102, 896, %s104, [#allocation12], 128, 128, 8
    $region41: #{tpu_custom_call.1} parent=1 // pred_fallthru
      _
    // Predicated region
    $region42: #{tpu_custom_call.1} parent=1 // pred_check
      _
    $region43: #{tpu_custom_call.1} parent=1 // pred_check_branch
      %111 = sbr.rel (0) target = $region45
    $region44: #{tpu_custom_call.1} parent=1 // pred_region
      _
    $region45: #{tpu_custom_call.1} parent=1 // pred_fallthru
      _
    // Predicated region
    $region46: #{tpu_custom_call.1} parent=1 // pred_check
      _
    $region47: #{tpu_custom_call.1} parent=1 // pred_check_branch
      %113 = sbr.rel (0) target = $region49
    $region48: #{tpu_custom_call.1} parent=1 // pred_region
      %115 = vsyncadd [#allocation12], 0
      %s117 = sshll.u32 %s11, 4
      %s118 = int_to_ptr.hbm [resolvable:$true] %s117
      %s119 = sshll.u32 [#allocation13], 4
      %s120 = int_to_ptr.vmem [resolvable:$true] %s119
      %122 = dma.hbm_to_vmem [thread:$0]  %s118, 32, %s120, [#allocation12]
    $region49: #{tpu_custom_call.1} parent=1 // pred_fallthru
      _
    // Predicated region
    $region50: #{tpu_custom_call.1} parent=1 // pred_check
      _
    $region51: #{tpu_custom_call.1} parent=1 // pred_check_branch
      %124 = sbr.rel (0) target = $region53
    $region52: #{tpu_custom_call.1} parent=1 // pred_region
      %126 = vsyncadd [#allocation15], 0
      %s127 = sshll.u32 %s12, 4
      %s128 = int_to_ptr.hbm [resolvable:$true] %s127
      %s129 = sshll.u32 [#allocation14], 4
      %s130 = int_to_ptr.vmem [resolvable:$true] %s129
      %135 = dma.hbm_to_vmem [thread:$0]  %s128, 512, %s130, [#allocation15], 64, 64, 4
    $region53: #{tpu_custom_call.1} parent=1 // pred_fallthru
      _
    // Predicated region
    $region54: #{tpu_custom_call.1} parent=1 // pred_check
      _
    $region55: #{tpu_custom_call.1} parent=1 // pred_check_branch
      %137 = sbr.rel (0) target = $region57
    $region56: #{tpu_custom_call.1} parent=1 // pred_region
      %139 = vsyncadd [#allocation15], 0
      %s140 = sshll.u32 %s13, 4
      %s141 = int_to_ptr.hbm [resolvable:$true] %s140
      %s142 = sshll.u32 [#allocation16], 4
      %s143 = int_to_ptr.vmem [resolvable:$true] %s142
      %148 = dma.hbm_to_vmem [thread:$0]  %s141, 512, %s143, [#allocation15], 64, 64, 4
    $region57: #{tpu_custom_call.1} parent=1 // pred_fallthru
      _
    // Predicated region
    $region58: #{tpu_custom_call.1} parent=1 // pred_check
      _
    $region59: #{tpu_custom_call.1} parent=1 // pred_check_branch
      %150 = sbr.rel (0) target = $region61
    $region60: #{tpu_custom_call.1} parent=1 // pred_region
      _
    $region61: #{tpu_custom_call.1} parent=1 // pred_fallthru
      _
    // Predicated region
    $region62: #{tpu_custom_call.1} parent=1 // pred_check
      _
    $region63: #{tpu_custom_call.1} parent=1 // pred_check_branch
      %152 = sbr.rel (0) target = $region65
    $region64: #{tpu_custom_call.1} parent=1 // pred_region
      _
    $region65: #{tpu_custom_call.1} parent=1 // pred_fallthru
      _
    // Predicated region
    $region66: #{tpu_custom_call.1} parent=1 // pred_check
      _
    $region67: #{tpu_custom_call.1} parent=1 // pred_check_branch
      %154 = sbr.rel (0) target = $region69
    $region68: #{tpu_custom_call.1} parent=1 // pred_region
      %156 = vsyncadd [#allocation18], 0
      %s157 = sshll.u32 %s16, 4
      %s158 = int_to_ptr.hbm [resolvable:$true] %s157
      %s159 = sshll.u32 [#allocation17], 4
      %s160 = int_to_ptr.vmem [resolvable:$true] %s159
      %165 = dma.hbm_to_vmem [thread:$0]  %s158, 512, %s160, [#allocation18], 64, 64, 4
    $region69: #{tpu_custom_call.1} parent=1 // pred_fallthru
      _
    // Predicated region
    $region70: #{tpu_custom_call.1} parent=1 // pred_check
      _
    $region71: #{tpu_custom_call.1} parent=1 // pred_check_branch
      %167 = sbr.rel (0) target = $region73
    $region72: #{tpu_custom_call.1} parent=1 // pred_region
      %169 = vsyncadd [#allocation18], 0
      %s171 = sshll.u32 %s17, 4
      %s172 = int_to_ptr.hbm [resolvable:$true] %s171
      %s173 = sshll.u32 [#allocation19], 4
      %s174 = int_to_ptr.vmem [resolvable:$true] %s173
      %176 = dma.hbm_to_vmem [thread:$0]  %s172, 16, %s174, [#allocation18]
    $region73: #{tpu_custom_call.1} parent=1 // pred_fallthru
      _
    // Predicated region
    $region74: #{tpu_custom_call.1} parent=1 // pred_check
      _
    $region75: #{tpu_custom_call.1} parent=1 // pred_check_branch
      %178 = sbr.rel (0) target = $region77
    $region76: #{tpu_custom_call.1} parent=1 // pred_region
      _
    $region77: #{tpu_custom_call.1} parent=1 // pred_fallthru
      _
    // Predicated region
    $region78: #{tpu_custom_call.1} parent=1 // pred_check
      _
    $region79: #{tpu_custom_call.1} parent=1 // pred_check_branch
      %180 = sbr.rel (0) target = $region81
    $region80: #{tpu_custom_call.1} parent=1 // pred_region
      _
    $region81: #{tpu_custom_call.1} parent=1 // pred_fallthru
      _
    // Predicated region
    $region82: #{tpu_custom_call.1} parent=1 // pred_check
      _
    $region83: #{tpu_custom_call.1} parent=1 // pred_check_branch
      %182 = sbr.rel (0) target = $region85
    $region84: #{tpu_custom_call.1} parent=1 // pred_region
      %184 = dma.done [#allocation3], 128
    $region85: #{tpu_custom_call.1} parent=1 // pred_fallthru
      _
    // Predicated region
    $region86: #{tpu_custom_call.1} parent=1 // pred_check
      _
    $region87: #{tpu_custom_call.1} parent=1 // pred_check_branch
      %186 = sbr.rel (0) target = $region89
    $region88: #{tpu_custom_call.1} parent=1 // pred_region
      %188 = dma.done [#allocation6], 32
    $region89: #{tpu_custom_call.1} parent=1 // pred_fallthru
      _
    // Predicated region
    $region90: #{tpu_custom_call.1} parent=1 // pred_check
      _
    $region91: #{tpu_custom_call.1} parent=1 // pred_check_branch
      %190 = sbr.rel (0) target = $region93
    $region92: #{tpu_custom_call.1} parent=1 // pred_region
      %192 = dma.done [#allocation6], 32
    $region93: #{tpu_custom_call.1} parent=1 // pred_fallthru
      _
    // Predicated region
    $region94: #{tpu_custom_call.1} parent=1 // pred_check
      _
    $region95: #{tpu_custom_call.1} parent=1 // pred_check_branch
      %194 = sbr.rel (0) target = $region97
    $region96: #{tpu_custom_call.1} parent=1 // pred_region
      %196 = dma.done [#allocation9], 32
    $region97: #{tpu_custom_call.1} parent=1 // pred_fallthru
      _
    // Predicated region
    $region98: #{tpu_custom_call.1} parent=1 // pred_check
      _
    $region99: #{tpu_custom_call.1} parent=1 // pred_check_branch
      %198 = sbr.rel (0) target = $region101
    $region100: #{tpu_custom_call.1} parent=1 // pred_region
      %200 = dma.done [#allocation9], 32
    $region101: #{tpu_custom_call.1} parent=1 // pred_fallthru
      _
    // Predicated region
    $region102: #{tpu_custom_call.1} parent=1 // pred_check
      _
    $region103: #{tpu_custom_call.1} parent=1 // pred_check_branch
      %202 = sbr.rel (0) target = $region105
    $region104: #{tpu_custom_call.1} parent=1 // pred_region
      %204 = dma.done [#allocation12], 896
    $region105: #{tpu_custom_call.1} parent=1 // pred_fallthru
      _
    // Predicated region
    $region106: #{tpu_custom_call.1} parent=1 // pred_check
      _
    $region107: #{tpu_custom_call.1} parent=1 // pred_check_branch
      %206 = sbr.rel (0) target = $region109
    $region108: #{tpu_custom_call.1} parent=1 // pred_region
      %208 = dma.done [#allocation12], 32
    $region109: #{tpu_custom_call.1} parent=1 // pred_fallthru
      _
    // Predicated region
    $region110: #{tpu_custom_call.1} parent=1 // pred_check
      _
    $region111: #{tpu_custom_call.1} parent=1 // pred_check_branch
      %210 = sbr.rel (0) target = $region113
    $region112: #{tpu_custom_call.1} parent=1 // pred_region
      %212 = dma.done [#allocation15], 512
    $region113: #{tpu_custom_call.1} parent=1 // pred_fallthru
      _
    // Predicated region
    $region114: #{tpu_custom_call.1} parent=1 // pred_check
      _
    $region115: #{tpu_custom_call.1} parent=1 // pred_check_branch
      %214 = sbr.rel (0) target = $region117
    $region116: #{tpu_custom_call.1} parent=1 // pred_region
      %216 = dma.done [#allocation15], 512
    $region117: #{tpu_custom_call.1} parent=1 // pred_fallthru
      _
    // Predicated region
    $region118: #{tpu_custom_call.1} parent=1 // pred_check
      _
    $region119: #{tpu_custom_call.1} parent=1 // pred_check_branch
      %218 = sbr.rel (0) target = $region121
    $region120: #{tpu_custom_call.1} parent=1 // pred_region
      %220 = dma.done [#allocation18], 512
    $region121: #{tpu_custom_call.1} parent=1 // pred_fallthru
      _
    // Predicated region
    $region122: #{tpu_custom_call.1} parent=1 // pred_check
      _
    $region123: #{tpu_custom_call.1} parent=1 // pred_check_branch
      %222 = sbr.rel (0) target = $region125
    $region124: #{tpu_custom_call.1} parent=1 // pred_region
      %224 = dma.done [#allocation18], 16
    $region125: #{tpu_custom_call.1} parent=1 // pred_fallthru
      _
    %v226 = vld [vmem:[%s7] sm:$0xff]
    %v227 = vld [vmem:[%s7 + $0x8] sm:$0xff]
    %v228 = vld [vmem:[%s7 + $0x10] sm:$0xff]
    %v229 = vld [vmem:[%s7 + $0x18] sm:$0xff]
    %v230 = vld [vmem:[%s7 + $0x20] sm:$0xff]
    %v231 = vld [vmem:[%s7 + $0x28] sm:$0xff]
    %v232 = vld [vmem:[%s7 + $0x30] sm:$0xff]
    %v233 = vld [vmem:[%s7 + $0x38] sm:$0xff]
    %v234 = vld [vmem:[%s10] sm:$0xff]
    %v235 = vld [vmem:[%s10 + $0x8] sm:$0xff]
    %v236 = vld [vmem:[%s10 + $0x10] sm:$0xff]
    %v237 = vld [vmem:[%s10 + $0x18] sm:$0xff]
    %v238 = vld [vmem:[%s10 + $0x20] sm:$0xff]
    %v239 = vld [vmem:[%s10 + $0x28] sm:$0xff]
    %v240 = vld [vmem:[%s10 + $0x30] sm:$0xff]
    %v241 = vld [vmem:[%s10 + $0x38] sm:$0xff]
    %v242 = vld [vmem:[#allocation8] sm:$0x3]
    %v243 = vld [vmem:[%s0] sm:$0xf]
    %v244 = vld [vmem:[%s0 + $0x4] sm:$0xf]
    %v245 = vld [vmem:[%s6] sm:$0xff]
    %v246 = vld [vmem:[%s6 + $0x8] sm:$0xff]
    %v247 = vld [vmem:[%s6 + $0x10] sm:$0xff]
    %v248 = vld [vmem:[%s6 + $0x18] sm:$0xff]
    %v249 = vld [vmem:[%s6 + $0x20] sm:$0xff]
    %v250 = vld [vmem:[%s6 + $0x28] sm:$0xff]
    %v251 = vld [vmem:[%s6 + $0x30] sm:$0x11]
    %v252 = vld [vmem:[#allocation10] sm:$0x3]
    %v254 = vperm.slane %v252, 0
    %v255 = vperm.slane %v252, 1
    %v260 = vunpack.c.l.b16 %v243
    %v261 = vunpack.c.l.b16 %v244
    %v262 = vpack.c.b16 %v261, %v260
    %v270 = vunpack.c.l.b16 %v245
    %v271 = vunpack.c.h.b16 %v245
    %v272 = vunpack.c.l.b16 %v246
    %v273 = vunpack.c.h.b16 %v246
    %v274 = vunpack.c.l.b16 %v247
    %v275 = vunpack.c.h.b16 %v247
    %v276 = vunpack.c.l.b16 %v248
    %v277 = vunpack.c.h.b16 %v248
    %v278 = vunpack.c.l.b16 %v249
    %v279 = vunpack.c.h.b16 %v249
    %v280 = vunpack.c.l.b16 %v250
    %v281 = vunpack.c.h.b16 %v250
    %v282 = vunpack.c.l.b16 %v251
    %v283 = vunpack.c.h.b16 %v251
    %v284 = vpack.c.b16 %v272, %v270
    %v285 = vpack.c.b16 %v273, %v271
    %v286 = vpack.c.b16 %v276, %v274
    %v287 = vpack.c.b16 %v277, %v275
    %v288 = vpack.c.b16 %v280, %v278
    %v289 = vpack.c.b16 %v281, %v279
    %v290 = vpack.c.b16 %v282, %v282
    %v291 = vpack.c.b16 %v283, %v283
    %vm298 = vcmask 408576
    %v300 = vsel %vm298, %v262, 0
    %vm302 = vcmask 1040384
    %v304 = vsel %vm302, %v290, 0
    %v307 = vsel %vm302, %v291, 0
    %309 = vmatpush.bf16.msra.mxu0 0
    %310 = vmatpush.bf16.msra.mxu0 0
    %311 = vmatpush.bf16.msra.mxu0 0
    %312 = vmatpush.bf16.msra.mxu0 0
    %313 = vmatpush.bf16.msra.mxu0 %v304
    %314 = vmatpush.bf16.msra.mxu0 %v288
    %315 = vmatpush.bf16.msra.mxu0 %v286
    %316 = vmatpush.bf16.msra.mxu0 %v284
    %317 = vmatmul.bf16.gmra.mxu0 %v300
    %v318 = vpop.f32.mrf.mxu0
    %v319 = vadd.f32 %v254, %v318
    %v320 = vpop.f32.mrf.mxu0
    %v321 = vadd.f32 %v254, %v320
    %322 = vdwg.mxu0
    %323 = vmatpush.bf16.msra.mxu0 0
    %324 = vmatpush.bf16.msra.mxu0 0
    %325 = vmatpush.bf16.msra.mxu0 0
    %326 = vmatpush.bf16.msra.mxu0 0
    %327 = vmatpush.bf16.msra.mxu0 %v307
    %328 = vmatpush.bf16.msra.mxu0 %v289
    %329 = vmatpush.bf16.msra.mxu0 %v287
    %330 = vmatpush.bf16.msra.mxu0 %v285
    %331 = vmatmul.bf16.gmra.mxu0 %v300
    %v332 = vpop.f32.mrf.mxu0
    %v333 = vadd.f32 %v255, %v332
    %v334 = vpop.f32.mrf.mxu0
    %v335 = vadd.f32 %v255, %v334
    %336 = vdwg.mxu0
    %v337 = vld [vmem:[#allocation2] sm:$0xf]
    %v338 = vld [vmem:[#allocation2 + $0x4] sm:$0xf]
    %v339 = vld [vmem:[#allocation11] sm:$0xff]
    %v340 = vld [vmem:[#allocation11 + $0x8] sm:$0xff]
    %v341 = vld [vmem:[#allocation11 + $0x10] sm:$0xff]
    %v342 = vld [vmem:[#allocation11 + $0x18] sm:$0xff]
    %v343 = vld [vmem:[#allocation11 + $0x20] sm:$0xff]
    %v344 = vld [vmem:[#allocation11 + $0x28] sm:$0xff]
    %v345 = vld [vmem:[#allocation11 + $0x30] sm:$0x11]
    %v346 = vld [vmem:[#allocation13] sm:$0x3]
    %v348 = vperm.slane %v346, 0
    %v349 = vperm.slane %v346, 1
    %v354 = vunpack.c.l.b16 %v337
    %v355 = vunpack.c.l.b16 %v338
    %v356 = vpack.c.b16 %v355, %v354
    %v364 = vunpack.c.l.b16 %v339
    %v365 = vunpack.c.h.b16 %v339
    %v366 = vunpack.c.l.b16 %v340
    %v367 = vunpack.c.h.b16 %v340
    %v368 = vunpack.c.l.b16 %v341
    %v369 = vunpack.c.h.b16 %v341
    %v370 = vunpack.c.l.b16 %v342
    %v371 = vunpack.c.h.b16 %v342
    %v372 = vunpack.c.l.b16 %v343
    %v373 = vunpack.c.h.b16 %v343
    %v374 = vunpack.c.l.b16 %v344
    %v375 = vunpack.c.h.b16 %v344
    %v376 = vunpack.c.l.b16 %v345
    %v377 = vunpack.c.h.b16 %v345
    %v378 = vpack.c.b16 %v366, %v364
    %v379 = vpack.c.b16 %v367, %v365
    %v380 = vpack.c.b16 %v370, %v368
    %v381 = vpack.c.b16 %v371, %v369
    %v382 = vpack.c.b16 %v374, %v372
    %v383 = vpack.c.b16 %v375, %v373
    %v384 = vpack.c.b16 %v376, %v376
    %v385 = vpack.c.b16 %v377, %v377
    %v393 = vsel %vm298, %v356, 0
    %v396 = vsel %vm302, %v384, 0
    %v399 = vsel %vm302, %v385, 0
    %401 = vmatpush.bf16.msra.mxu0 0
    %402 = vmatpush.bf16.msra.mxu0 0
    %403 = vmatpush.bf16.msra.mxu0 0
    %404 = vmatpush.bf16.msra.mxu0 0
    %405 = vmatpush.bf16.msra.mxu0 %v396
    %406 = vmatpush.bf16.msra.mxu0 %v382
    %407 = vmatpush.bf16.msra.mxu0 %v380
    %408 = vmatpush.bf16.msra.mxu0 %v378
    %409 = vmatmul.bf16.gmra.mxu0 %v393
    %v410 = vpop.f32.mrf.mxu0
    %v411 = vadd.f32 %v348, %v410
    %v412 = vpop.f32.mrf.mxu0
    %v413 = vadd.f32 %v348, %v412
    %414 = vdwg.mxu0
    %415 = vmatpush.bf16.msra.mxu0 0
    %416 = vmatpush.bf16.msra.mxu0 0
    %417 = vmatpush.bf16.msra.mxu0 0
    %418 = vmatpush.bf16.msra.mxu0 0
    %419 = vmatpush.bf16.msra.mxu0 %v399
    %420 = vmatpush.bf16.msra.mxu0 %v383
    %421 = vmatpush.bf16.msra.mxu0 %v381
    %422 = vmatpush.bf16.msra.mxu0 %v379
    %423 = vmatmul.bf16.gmra.mxu0 %v393
    %v424 = vpop.f32.mrf.mxu0
    %v425 = vadd.f32 %v349, %v424
    %v426 = vpop.f32.mrf.mxu0
    %v427 = vadd.f32 %v349, %v426
    %428 = vdwg.mxu0
    %v437 = vunpack.c.l.b16 %v226
    %v438 = vunpack.c.h.b16 %v226
    %v439 = vunpack.c.l.b16 %v227
    %v440 = vunpack.c.h.b16 %v227
    %v441 = vunpack.c.l.b16 %v228
    %v442 = vunpack.c.h.b16 %v228
    %v443 = vunpack.c.l.b16 %v229
    %v444 = vunpack.c.h.b16 %v229
    %v445 = vunpack.c.l.b16 %v230
    %v446 = vunpack.c.h.b16 %v230
    %v447 = vunpack.c.l.b16 %v231
    %v448 = vunpack.c.h.b16 %v231
    %v449 = vunpack.c.l.b16 %v232
    %v450 = vunpack.c.h.b16 %v232
    %v451 = vunpack.c.l.b16 %v233
    %v452 = vunpack.c.h.b16 %v233
    %v453 = vpack.c.b16 %v439, %v437
    %v454 = vpack.c.b16 %v440, %v438
    %v455 = vpack.c.b16 %v443, %v441
    %v456 = vpack.c.b16 %v444, %v442
    %v457 = vpack.c.b16 %v447, %v445
    %v458 = vpack.c.b16 %v448, %v446
    %v459 = vpack.c.b16 %v451, %v449
    %v460 = vpack.c.b16 %v452, %v450
    %vm469 = vcmask 523264
    %v471 = vsel %vm469, 0, 0
    %473 = vmatpush.bf16.msra.mxu0 0
    %474 = vmatpush.bf16.msra.mxu0 0
    %475 = vmatpush.bf16.msra.mxu0 0
    %476 = vmatpush.bf16.msra.mxu0 0
    %477 = vmatpush.bf16.msra.mxu0 %v459
    %478 = vmatpush.bf16.msra.mxu0 %v457
    %479 = vmatpush.bf16.msra.mxu0 %v455
    %480 = vmatpush.bf16.msra.mxu0 %v453
    %481 = vmatmul.bf16.gmra.mxu0 %v471
    %v482 = vpop.f32.mrf.mxu0
    %v483 = vadd.f32 0.0, %v482
    %v484 = vpop.f32.mrf.mxu0
    %485 = vdwg.mxu0
    %486 = vmatpush.bf16.msra.mxu0 0
    %487 = vmatpush.bf16.msra.mxu0 0
    %488 = vmatpush.bf16.msra.mxu0 0
    %489 = vmatpush.bf16.msra.mxu0 0
    %490 = vmatpush.bf16.msra.mxu0 %v460
    %491 = vmatpush.bf16.msra.mxu0 %v458
    %492 = vmatpush.bf16.msra.mxu0 %v456
    %493 = vmatpush.bf16.msra.mxu0 %v454
    %494 = vmatmul.bf16.gmra.mxu0 %v471
    %v495 = vpop.f32.mrf.mxu0
    %v496 = vadd.f32 0.0, %v495
    %v497 = vpop.f32.mrf.mxu0
    %498 = vdwg.mxu0
    %v499 = vadd.f32 %v319, %v483
    %v500 = vadd.f32 %v333, %v496
    %v501 = vmul.f32 %v499, 0.5
    %v502 = vmul.f32 %v500, 0.5
    %v503 = vtanh.pop %v501
    %v504 = vtanh.pop %v502
    %v505 = vmul.f32 %v503, 0.5
    %v506 = vmul.f32 %v504, 0.5
    %v507 = vadd.f32 %v505, 0.5
    %v508 = vadd.f32 %v506, 0.5
    %v509 = vtanh.pop %v500
    %v510 = vmul.f32 %v507, 0.0
    %512 = vrot.lane.b32.xlu0 %v509, 64
    %v513 = vpop.permute.xlu0 %512
    %v515 = vmul.f32 %v507, %v513
    %517 = vrot.lane.b32.xlu0 %v515, 64
    %v518 = vpop.permute.xlu0 %517
    %v520 = vadd.f32 %v510, %v518
    %v521 = vtanh.pop %v520
    %523 = vrot.lane.b32.xlu0 %v521, 64
    %v524 = vpop.permute.xlu0 %523
    %v526 = vmul.f32 %v508, %v524
    %v527 = vpack.c.bf16 %v526, %v526
    %v529 = vsel %vm469, %v527, 0
    %531 = vmatpush.bf16.msra.mxu0 0
    %532 = vmatpush.bf16.msra.mxu0 0
    %533 = vmatpush.bf16.msra.mxu0 0
    %534 = vmatpush.bf16.msra.mxu0 0
    %535 = vmatpush.bf16.msra.mxu0 %v459
    %536 = vmatpush.bf16.msra.mxu0 %v457
    %537 = vmatpush.bf16.msra.mxu0 %v455
    %538 = vmatpush.bf16.msra.mxu0 %v453
    %539 = vmatmul.bf16.gmra.mxu0 %v529
    %v540 = vpop.f32.mrf.mxu0
    %v541 = vadd.f32 0.0, %v540
    %v542 = vpop.f32.mrf.mxu0
    %543 = vdwg.mxu0
    %544 = vmatpush.bf16.msra.mxu0 0
    %545 = vmatpush.bf16.msra.mxu0 0
    %546 = vmatpush.bf16.msra.mxu0 0
    %547 = vmatpush.bf16.msra.mxu0 0
    %548 = vmatpush.bf16.msra.mxu0 %v460
    %549 = vmatpush.bf16.msra.mxu0 %v458
    %550 = vmatpush.bf16.msra.mxu0 %v456
    %551 = vmatpush.bf16.msra.mxu0 %v454
    %552 = vmatmul.bf16.gmra.mxu0 %v529
    %v553 = vpop.f32.mrf.mxu0
    %v554 = vadd.f32 0.0, %v553
    %v555 = vpop.f32.mrf.mxu0
    %556 = vdwg.mxu0
    %v559 = vrot.slane %v541, 6
    %v560 = vrot.slane %v554, 6
    %v563 = vadd.f32 %v319, %v559
    %v564 = vadd.f32 %v333, %v560
    %v565 = vmul.f32 %v563, 0.5
    %v566 = vmul.f32 %v564, 0.5
    %v567 = vtanh.pop %v565
    %v568 = vtanh.pop %v566
    %v569 = vmul.f32 %v567, 0.5
    %v570 = vmul.f32 %v568, 0.5
    %v571 = vadd.f32 %v569, 0.5
    %v572 = vadd.f32 %v570, 0.5
    %v573 = vtanh.pop %v564
    %v575 = vrot.slane %v520, 6
    %v577 = vmul.f32 %v571, %v575
    %579 = vrot.lane.b32.xlu0 %v573, 64
    %v580 = vpop.permute.xlu0 %579
    %v582 = vmul.f32 %v571, %v580
    %584 = vrot.lane.b32.xlu0 %v582, 64
    %v585 = vpop.permute.xlu0 %584
    %v587 = vadd.f32 %v577, %v585
    %v588 = vtanh.pop %v587
    %590 = vrot.lane.b32.xlu0 %v588, 64
    %v591 = vpop.permute.xlu0 %590
    %v593 = vmul.f32 %v572, %v591
    %v594 = vpack.c.bf16 %v593, %v593
    %v596 = vrot.slane %v594, 1
    %v598 = vsel %vm469, %v596, 0
    %600 = vmatpush.bf16.msra.mxu0 0
    %601 = vmatpush.bf16.msra.mxu0 0
    %602 = vmatpush.bf16.msra.mxu0 0
    %603 = vmatpush.bf16.msra.mxu0 0
    %604 = vmatpush.bf16.msra.mxu0 %v459
    %605 = vmatpush.bf16.msra.mxu0 %v457
    %606 = vmatpush.bf16.msra.mxu0 %v455
    %607 = vmatpush.bf16.msra.mxu0 %v453
    %608 = vmatmul.bf16.gmra.mxu0 %v598
    %v609 = vpop.f32.mrf.mxu0
    %v610 = vadd.f32 0.0, %v609
    %v611 = vpop.f32.mrf.mxu0
    %612 = vdwg.mxu0
    %613 = vmatpush.bf16.msra.mxu0 0
    %614 = vmatpush.bf16.msra.mxu0 0
    %615 = vmatpush.bf16.msra.mxu0 0
    %616 = vmatpush.bf16.msra.mxu0 0
    %617 = vmatpush.bf16.msra.mxu0 %v460
    %618 = vmatpush.bf16.msra.mxu0 %v458
    %619 = vmatpush.bf16.msra.mxu0 %v456
    %620 = vmatpush.bf16.msra.mxu0 %v454
    %621 = vmatmul.bf16.gmra.mxu0 %v598
    %v622 = vpop.f32.mrf.mxu0
    %v623 = vadd.f32 0.0, %v622
    %v624 = vpop.f32.mrf.mxu0
    %625 = vdwg.mxu0
    %v628 = vrot.slane %v610, 4
    %v629 = vrot.slane %v623, 4
    %v632 = vadd.f32 %v319, %v628
    %v633 = vadd.f32 %v333, %v629
    %v634 = vmul.f32 %v632, 0.5
    %v635 = vmul.f32 %v633, 0.5
    %v636 = vtanh.pop %v634
    %v637 = vtanh.pop %v635
    %v638 = vmul.f32 %v636, 0.5
    %v639 = vmul.f32 %v637, 0.5
    %v640 = vadd.f32 %v638, 0.5
    %v641 = vadd.f32 %v639, 0.5
    %v642 = vtanh.pop %v633
    %v644 = vrot.slane %v587, 6
    %v646 = vmul.f32 %v640, %v644
    %648 = vrot.lane.b32.xlu0 %v642, 64
    %v649 = vpop.permute.xlu0 %648
    %v651 = vmul.f32 %v640, %v649
    %653 = vrot.lane.b32.xlu0 %v651, 64
    %v654 = vpop.permute.xlu0 %653
    %v656 = vadd.f32 %v646, %v654
    %v657 = vtanh.pop %v656
    %659 = vrot.lane.b32.xlu0 %v657, 64
    %v660 = vpop.permute.xlu0 %659
    %v662 = vmul.f32 %v641, %v660
    %v663 = vpack.c.bf16 %v662, %v662
    %v665 = vrot.slane %v663, 2
    %v667 = vsel %vm469, %v665, 0
    %669 = vmatpush.bf16.msra.mxu0 0
    %670 = vmatpush.bf16.msra.mxu0 0
    %671 = vmatpush.bf16.msra.mxu0 0
    %672 = vmatpush.bf16.msra.mxu0 0
    %673 = vmatpush.bf16.msra.mxu0 %v459
    %674 = vmatpush.bf16.msra.mxu0 %v457
    %675 = vmatpush.bf16.msra.mxu0 %v455
    %676 = vmatpush.bf16.msra.mxu0 %v453
    %677 = vmatmul.bf16.gmra.mxu0 %v667
    %v678 = vpop.f32.mrf.mxu0
    %v679 = vadd.f32 0.0, %v678
    %v680 = vpop.f32.mrf.mxu0
    %681 = vdwg.mxu0
    %682 = vmatpush.bf16.msra.mxu0 0
    %683 = vmatpush.bf16.msra.mxu0 0
    %684 = vmatpush.bf16.msra.mxu0 0
    %685 = vmatpush.bf16.msra.mxu0 0
    %686 = vmatpush.bf16.msra.mxu0 %v460
    %687 = vmatpush.bf16.msra.mxu0 %v458
    %688 = vmatpush.bf16.msra.mxu0 %v456
    %689 = vmatpush.bf16.msra.mxu0 %v454
    %690 = vmatmul.bf16.gmra.mxu0 %v667
    %v691 = vpop.f32.mrf.mxu0
    %v692 = vadd.f32 0.0, %v691
    %v693 = vpop.f32.mrf.mxu0
    %694 = vdwg.mxu0
    %v697 = vrot.slane %v679, 2
    %v698 = vrot.slane %v692, 2
    %v701 = vadd.f32 %v319, %v697
    %v702 = vadd.f32 %v333, %v698
    %v703 = vmul.f32 %v701, 0.5
    %v704 = vmul.f32 %v702, 0.5
    %v705 = vtanh.pop %v703
    %v706 = vtanh.pop %v704
    %v707 = vmul.f32 %v705, 0.5
    %v708 = vmul.f32 %v706, 0.5
    %v709 = vadd.f32 %v707, 0.5
    %v710 = vadd.f32 %v708, 0.5
    %v711 = vtanh.pop %v702
    %v713 = vrot.slane %v656, 6
    %v715 = vmul.f32 %v709, %v713
    %717 = vrot.lane.b32.xlu0 %v711, 64
    %v718 = vpop.permute.xlu0 %717
    %v720 = vmul.f32 %v709, %v718
    %722 = vrot.lane.b32.xlu0 %v720, 64
    %v723 = vpop.permute.xlu0 %722
    %v725 = vadd.f32 %v715, %v723
    %v726 = vtanh.pop %v725
    %728 = vrot.lane.b32.xlu0 %v726, 64
    %v729 = vpop.permute.xlu0 %728
    %v731 = vmul.f32 %v710, %v729
    %v732 = vpack.c.bf16 %v731, %v731
    %v734 = vrot.slane %v732, 3
    %v736 = vsel %vm469, %v734, 0
    %738 = vmatpush.bf16.msra.mxu0 0
    %739 = vmatpush.bf16.msra.mxu0 0
    %740 = vmatpush.bf16.msra.mxu0 0
    %741 = vmatpush.bf16.msra.mxu0 0
    %742 = vmatpush.bf16.msra.mxu0 %v459
    %743 = vmatpush.bf16.msra.mxu0 %v457
    %744 = vmatpush.bf16.msra.mxu0 %v455
    %745 = vmatpush.bf16.msra.mxu0 %v453
    %746 = vmatmul.bf16.gmra.mxu0 %v736
    %v747 = vpop.f32.mrf.mxu0
    %v748 = vadd.f32 0.0, %v747
    %v749 = vpop.f32.mrf.mxu0
    %750 = vdwg.mxu0
    %751 = vmatpush.bf16.msra.mxu0 0
    %752 = vmatpush.bf16.msra.mxu0 0
    %753 = vmatpush.bf16.msra.mxu0 0
    %754 = vmatpush.bf16.msra.mxu0 0
    %755 = vmatpush.bf16.msra.mxu0 %v460
    %756 = vmatpush.bf16.msra.mxu0 %v458
    %757 = vmatpush.bf16.msra.mxu0 %v456
    %758 = vmatpush.bf16.msra.mxu0 %v454
    %759 = vmatmul.bf16.gmra.mxu0 %v736
    %v760 = vpop.f32.mrf.mxu0
    %v761 = vadd.f32 0.0, %v760
    %v762 = vpop.f32.mrf.mxu0
    %763 = vdwg.mxu0
    %v764 = vadd.f32 %v321, %v748
    %v765 = vadd.f32 %v335, %v761
    %v766 = vmul.f32 %v764, 0.5
    %v767 = vmul.f32 %v765, 0.5
    %v768 = vtanh.pop %v766
    %v769 = vtanh.pop %v767
    %v770 = vmul.f32 %v768, 0.5
    %v771 = vmul.f32 %v769, 0.5
    %v772 = vadd.f32 %v770, 0.5
    %v773 = vadd.f32 %v771, 0.5
    %v774 = vtanh.pop %v765
    %v776 = vrot.slane %v725, 6
    %v778 = vmul.f32 %v772, %v776
    %780 = vrot.lane.b32.xlu0 %v774, 64
    %v781 = vpop.permute.xlu0 %780
    %v783 = vmul.f32 %v772, %v781
    %785 = vrot.lane.b32.xlu0 %v783, 64
    %v786 = vpop.permute.xlu0 %785
    %v788 = vadd.f32 %v778, %v786
    %v789 = vtanh.pop %v788
    %791 = vrot.lane.b32.xlu0 %v789, 64
    %v792 = vpop.permute.xlu0 %791
    %v794 = vmul.f32 %v773, %v792
    %v795 = vpack.c.bf16 %v794, %v794
    %v797 = vsel %vm469, %v795, 0
    %799 = vmatpush.bf16.msra.mxu0 0
    %800 = vmatpush.bf16.msra.mxu0 0
    %801 = vmatpush.bf16.msra.mxu0 0
    %802 = vmatpush.bf16.msra.mxu0 0
    %803 = vmatpush.bf16.msra.mxu0 %v459
    %804 = vmatpush.bf16.msra.mxu0 %v457
    %805 = vmatpush.bf16.msra.mxu0 %v455
    %806 = vmatpush.bf16.msra.mxu0 %v453
    %807 = vmatmul.bf16.gmra.mxu0 %v797
    %v808 = vpop.f32.mrf.mxu0
    %v809 = vadd.f32 0.0, %v808
    %v810 = vpop.f32.mrf.mxu0
    %811 = vdwg.mxu0
    %812 = vmatpush.bf16.msra.mxu0 0
    %813 = vmatpush.bf16.msra.mxu0 0
    %814 = vmatpush.bf16.msra.mxu0 0
    %815 = vmatpush.bf16.msra.mxu0 0
    %816 = vmatpush.bf16.msra.mxu0 %v460
    %817 = vmatpush.bf16.msra.mxu0 %v458
    %818 = vmatpush.bf16.msra.mxu0 %v456
    %819 = vmatpush.bf16.msra.mxu0 %v454
    %820 = vmatmul.bf16.gmra.mxu0 %v797
    %v821 = vpop.f32.mrf.mxu0
    %v822 = vadd.f32 0.0, %v821
    %v823 = vpop.f32.mrf.mxu0
    %824 = vdwg.mxu0
    %v827 = vrot.slane %v809, 6
    %v828 = vrot.slane %v822, 6
    %v831 = vadd.f32 %v321, %v827
    %v832 = vadd.f32 %v335, %v828
    %v833 = vmul.f32 %v831, 0.5
    %v834 = vmul.f32 %v832, 0.5
    %v835 = vtanh.pop %v833
    %v836 = vtanh.pop %v834
    %v837 = vmul.f32 %v835, 0.5
    %v838 = vmul.f32 %v836, 0.5
    %v839 = vadd.f32 %v837, 0.5
    %v840 = vadd.f32 %v838, 0.5
    %v841 = vtanh.pop %v832
    %v843 = vrot.slane %v788, 6
    %v845 = vmul.f32 %v839, %v843
    %847 = vrot.lane.b32.xlu0 %v841, 64
    %v848 = vpop.permute.xlu0 %847
    %v850 = vmul.f32 %v839, %v848
    %852 = vrot.lane.b32.xlu0 %v850, 64
    %v853 = vpop.permute.xlu0 %852
    %v855 = vadd.f32 %v845, %v853
    %v856 = vtanh.pop %v855
    %858 = vrot.lane.b32.xlu0 %v856, 64
    %v859 = vpop.permute.xlu0 %858
    %v861 = vmul.f32 %v840, %v859
    %v862 = vpack.c.bf16 %v861, %v861
    %v864 = vrot.slane %v862, 1
    %v866 = vsel %vm469, %v864, 0
    %868 = vmatpush.bf16.msra.mxu0 0
    %869 = vmatpush.bf16.msra.mxu0 0
    %870 = vmatpush.bf16.msra.mxu0 0
    %871 = vmatpush.bf16.msra.mxu0 0
    %872 = vmatpush.bf16.msra.mxu0 %v459
    %873 = vmatpush.bf16.msra.mxu0 %v457
    %874 = vmatpush.bf16.msra.mxu0 %v455
    %875 = vmatpush.bf16.msra.mxu0 %v453
    %876 = vmatmul.bf16.gmra.mxu0 %v866
    %v877 = vpop.f32.mrf.mxu0
    %v878 = vadd.f32 0.0, %v877
    %v879 = vpop.f32.mrf.mxu0
    %880 = vdwg.mxu0
    %881 = vmatpush.bf16.msra.mxu0 0
    %882 = vmatpush.bf16.msra.mxu0 0
    %883 = vmatpush.bf16.msra.mxu0 0
    %884 = vmatpush.bf16.msra.mxu0 0
    %885 = vmatpush.bf16.msra.mxu0 %v460
    %886 = vmatpush.bf16.msra.mxu0 %v458
    %887 = vmatpush.bf16.msra.mxu0 %v456
    %888 = vmatpush.bf16.msra.mxu0 %v454
    %889 = vmatmul.bf16.gmra.mxu0 %v866
    %v890 = vpop.f32.mrf.mxu0
    %v891 = vadd.f32 0.0, %v890
    %v892 = vpop.f32.mrf.mxu0
    %893 = vdwg.mxu0
    %v896 = vrot.slane %v878, 4
    %v897 = vrot.slane %v891, 4
    %v900 = vadd.f32 %v321, %v896
    %v901 = vadd.f32 %v335, %v897
    %v902 = vmul.f32 %v900, 0.5
    %v903 = vmul.f32 %v901, 0.5
    %v904 = vtanh.pop %v902
    %v905 = vtanh.pop %v903
    %v906 = vmul.f32 %v904, 0.5
    %v907 = vmul.f32 %v905, 0.5
    %v908 = vadd.f32 %v906, 0.5
    %v909 = vadd.f32 %v907, 0.5
    %v910 = vtanh.pop %v901
    %v912 = vrot.slane %v855, 6
    %v914 = vmul.f32 %v908, %v912
    %916 = vrot.lane.b32.xlu0 %v910, 64
    %v917 = vpop.permute.xlu0 %916
    %v919 = vmul.f32 %v908, %v917
    %921 = vrot.lane.b32.xlu0 %v919, 64
    %v922 = vpop.permute.xlu0 %921
    %v924 = vadd.f32 %v914, %v922
    %v925 = vtanh.pop %v924
    %927 = vrot.lane.b32.xlu0 %v925, 64
    %v928 = vpop.permute.xlu0 %927
    %v930 = vmul.f32 %v909, %v928
    %v931 = vpack.c.bf16 %v930, %v930
    %v933 = vrot.slane %v931, 2
    %v935 = vsel %vm469, %v933, 0
    %937 = vmatpush.bf16.msra.mxu0 0
    %938 = vmatpush.bf16.msra.mxu0 0
    %939 = vmatpush.bf16.msra.mxu0 0
    %940 = vmatpush.bf16.msra.mxu0 0
    %941 = vmatpush.bf16.msra.mxu0 %v459
    %942 = vmatpush.bf16.msra.mxu0 %v457
    %943 = vmatpush.bf16.msra.mxu0 %v455
    %944 = vmatpush.bf16.msra.mxu0 %v453
    %945 = vmatmul.bf16.gmra.mxu0 %v935
    %v946 = vpop.f32.mrf.mxu0
    %v947 = vadd.f32 0.0, %v946
    %v948 = vpop.f32.mrf.mxu0
    %949 = vdwg.mxu0
    %950 = vmatpush.bf16.msra.mxu0 0
    %951 = vmatpush.bf16.msra.mxu0 0
    %952 = vmatpush.bf16.msra.mxu0 0
    %953 = vmatpush.bf16.msra.mxu0 0
    %954 = vmatpush.bf16.msra.mxu0 %v460
    %955 = vmatpush.bf16.msra.mxu0 %v458
    %956 = vmatpush.bf16.msra.mxu0 %v456
    %957 = vmatpush.bf16.msra.mxu0 %v454
    %958 = vmatmul.bf16.gmra.mxu0 %v935
    %v959 = vpop.f32.mrf.mxu0
    %v960 = vadd.f32 0.0, %v959
    %v961 = vpop.f32.mrf.mxu0
    %962 = vdwg.mxu0
    %v965 = vrot.slane %v947, 2
    %v966 = vrot.slane %v960, 2
    %v969 = vadd.f32 %v321, %v965
    %v970 = vadd.f32 %v335, %v966
    %v971 = vmul.f32 %v969, 0.5
    %v972 = vmul.f32 %v970, 0.5
    %v973 = vtanh.pop %v971
    %v974 = vtanh.pop %v972
    %v975 = vmul.f32 %v973, 0.5
    %v976 = vmul.f32 %v974, 0.5
    %v977 = vadd.f32 %v975, 0.5
    %v978 = vadd.f32 %v976, 0.5
    %v979 = vtanh.pop %v970
    %v981 = vrot.slane %v924, 6
    %v983 = vmul.f32 %v977, %v981
    %985 = vrot.lane.b32.xlu0 %v979, 64
    %v986 = vpop.permute.xlu0 %985
    %v988 = vmul.f32 %v977, %v986
    %990 = vrot.lane.b32.xlu0 %v988, 64
    %v991 = vpop.permute.xlu0 %990
    %v993 = vadd.f32 %v983, %v991
    %v994 = vtanh.pop %v993
    %996 = vrot.lane.b32.xlu0 %v994, 64
    %v997 = vpop.permute.xlu0 %996
    %v999 = vmul.f32 %v978, %v997
    %vm1000 = vcmask 1041408
    %v1001 = vsel %vm1000, %v526, %v593
    %vm1002 = vcmask 1043456
    %v1003 = vsel %vm1002, %v1001, %v662
    %vm1004 = vcmask 1045504
    %v1005 = vsel %vm1004, %v1003, %v731
    %v1006 = vsel %vm1000, %v794, %v861
    %v1007 = vsel %vm1002, %v1006, %v930
    %v1008 = vsel %vm1004, %v1007, %v999
    %v1009 = vsel %vm1000, %v520, %v587
    %v1010 = vsel %vm1002, %v1009, %v656
    %v1011 = vsel %vm1004, %v1010, %v725
    %v1012 = vsel %vm1000, %v788, %v855
    %v1013 = vsel %vm1002, %v1012, %v924
    %v1014 = vsel %vm1004, %v1013, %v993
    %v1015 = vld [vmem:[#allocation5] sm:$0x3]
    %vm1016 = vcmask 130048
    %v1018 = vsel %vm1016, %v1015, 0
    %1020 = vmatpush.msra.mxu0 0.0
    %1021 = vmatpush.msra.mxu0 0.0
    %1022 = vmatpush.msra.mxu0 0.0
    %1023 = vmatpush.msra.mxu0 0.0
    %1024 = vmatpush.msra.mxu0 0.0
    %1025 = vmatpush.msra.mxu0 0.0
    %1026 = vmatpush.msra.mxu0 0.0
    %1027 = vmatpush.msra.mxu0 0.0
    %1028 = vmatpush.msra.mxu0 0.0
    %1029 = vmatpush.msra.mxu0 0.0
    %1030 = vmatpush.msra.mxu0 0.0
    %1031 = vmatpush.msra.mxu0 0.0
    %1032 = vmatpush.msra.mxu0 0.0
    %1033 = vmatpush.msra.mxu0 0.0
    %1034 = vmatpush.msra.mxu0 %v1008
    %1035 = vmatpush.msra.mxu0 %v1005
    %1036 = vmatmul.f32.gmra.mxu0 %v1018
    %v1037 = vpop.f32.mrf.mxu0
    %v1038 = vadd.f32 0.0, %v1037
    %1039 = vdwg.mxu0
    %1042 = vrot.lane.b32.xlu0 %v1011, 64
    %v1043 = vpop.permute.xlu0 %1042
    %1044 = vrot.lane.b32.xlu0 %v1014, 64
    %v1045 = vpop.permute.xlu0 %1044
    %1048 = vmatpush.msra.mxu0 0.0
    %1049 = vmatpush.msra.mxu0 0.0
    %1050 = vmatpush.msra.mxu0 0.0
    %1051 = vmatpush.msra.mxu0 0.0
    %1052 = vmatpush.msra.mxu0 0.0
    %1053 = vmatpush.msra.mxu0 0.0
    %1054 = vmatpush.msra.mxu0 0.0
    %1055 = vmatpush.msra.mxu0 0.0
    %1056 = vmatpush.msra.mxu0 0.0
    %1057 = vmatpush.msra.mxu0 0.0
    %1058 = vmatpush.msra.mxu0 0.0
    %1059 = vmatpush.msra.mxu0 0.0
    %1060 = vmatpush.msra.mxu0 0.0
    %1061 = vmatpush.msra.mxu0 0.0
    %1062 = vmatpush.msra.mxu0 %v1045
    %1063 = vmatpush.msra.mxu0 %v1043
    %1064 = vmatmul.f32.gmra.mxu0 %v1018
    %v1065 = vpop.f32.mrf.mxu0
    %v1066 = vadd.f32 0.0, %v1065
    %1067 = vdwg.mxu0
    %v1068 = vpack.c.bf16 %v1038, %v1038
    %v1077 = vunpack.c.l.b16 %v234
    %v1078 = vunpack.c.h.b16 %v234
    %v1079 = vunpack.c.l.b16 %v235
    %v1080 = vunpack.c.h.b16 %v235
    %v1081 = vunpack.c.l.b16 %v236
    %v1082 = vunpack.c.h.b16 %v236
    %v1083 = vunpack.c.l.b16 %v237
    %v1084 = vunpack.c.h.b16 %v237
    %v1085 = vunpack.c.l.b16 %v238
    %v1086 = vunpack.c.h.b16 %v238
    %v1087 = vunpack.c.l.b16 %v239
    %v1088 = vunpack.c.h.b16 %v239
    %v1089 = vunpack.c.l.b16 %v240
    %v1090 = vunpack.c.h.b16 %v240
    %v1091 = vunpack.c.l.b16 %v241
    %v1092 = vunpack.c.h.b16 %v241
    %v1093 = vpack.c.b16 %v1079, %v1077
    %v1094 = vpack.c.b16 %v1080, %v1078
    %v1095 = vpack.c.b16 %v1083, %v1081
    %v1096 = vpack.c.b16 %v1084, %v1082
    %v1097 = vpack.c.b16 %v1087, %v1085
    %v1098 = vpack.c.b16 %v1088, %v1086
    %v1099 = vpack.c.b16 %v1091, %v1089
    %v1100 = vpack.c.b16 %v1092, %v1090
    %v1110 = vsel %vm469, %v1068, 0
    %1112 = vmatpush.bf16.msra.mxu0 0
    %1113 = vmatpush.bf16.msra.mxu0 0
    %1114 = vmatpush.bf16.msra.mxu0 0
    %1115 = vmatpush.bf16.msra.mxu0 0
    %1116 = vmatpush.bf16.msra.mxu0 %v1099
    %1117 = vmatpush.bf16.msra.mxu0 %v1097
    %1118 = vmatpush.bf16.msra.mxu0 %v1095
    %1119 = vmatpush.bf16.msra.mxu0 %v1093
    %1120 = vmatmul.bf16.gmra.mxu0 %v1110
    %v1121 = vpop.f32.mrf.mxu0
    %v1122 = vadd.f32 0.0, %v1121
    %v1123 = vpop.f32.mrf.mxu0
    %1124 = vdwg.mxu0
    %1125 = vmatpush.bf16.msra.mxu0 0
    %1126 = vmatpush.bf16.msra.mxu0 0
    %1127 = vmatpush.bf16.msra.mxu0 0
    %1128 = vmatpush.bf16.msra.mxu0 0
    %1129 = vmatpush.bf16.msra.mxu0 %v1100
    %1130 = vmatpush.bf16.msra.mxu0 %v1098
    %1131 = vmatpush.bf16.msra.mxu0 %v1096
    %1132 = vmatpush.bf16.msra.mxu0 %v1094
    %1133 = vmatmul.bf16.gmra.mxu0 %v1110
    %v1134 = vpop.f32.mrf.mxu0
    %v1135 = vadd.f32 0.0, %v1134
    %v1136 = vpop.f32.mrf.mxu0
    %1137 = vdwg.mxu0
    %v1138 = vadd.f32 %v411, %v1122
    %v1139 = vadd.f32 %v425, %v1135
    %v1140 = vmul.f32 %v1138, 0.5
    %v1141 = vmul.f32 %v1139, 0.5
    %v1142 = vtanh.pop %v1140
    %v1143 = vtanh.pop %v1141
    %v1144 = vmul.f32 %v1142, 0.5
    %v1145 = vmul.f32 %v1143, 0.5
    %v1146 = vadd.f32 %v1144, 0.5
    %v1147 = vadd.f32 %v1145, 0.5
    %v1148 = vtanh.pop %v1139
    %1150 = vrot.lane.b32.xlu0 %v1066, 64
    %v1151 = vpop.permute.xlu0 %1150
    %v1153 = vmul.f32 %v1146, %v1151
    %1155 = vrot.lane.b32.xlu0 %v1148, 64
    %v1156 = vpop.permute.xlu0 %1155
    %v1158 = vmul.f32 %v1146, %v1156
    %1160 = vrot.lane.b32.xlu0 %v1158, 64
    %v1161 = vpop.permute.xlu0 %1160
    %v1163 = vadd.f32 %v1153, %v1161
    %v1164 = vtanh.pop %v1163
    %1166 = vrot.lane.b32.xlu0 %v1164, 64
    %v1167 = vpop.permute.xlu0 %1166
    %v1169 = vmul.f32 %v1147, %v1167
    %v1170 = vpack.c.bf16 %v1169, %v1169
    %v1172 = vsel %vm469, %v1170, 0
    %1174 = vmatpush.bf16.msra.mxu0 0
    %1175 = vmatpush.bf16.msra.mxu0 0
    %1176 = vmatpush.bf16.msra.mxu0 0
    %1177 = vmatpush.bf16.msra.mxu0 0
    %1178 = vmatpush.bf16.msra.mxu0 %v1099
    %1179 = vmatpush.bf16.msra.mxu0 %v1097
    %1180 = vmatpush.bf16.msra.mxu0 %v1095
    %1181 = vmatpush.bf16.msra.mxu0 %v1093
    %1182 = vmatmul.bf16.gmra.mxu0 %v1172
    %v1183 = vpop.f32.mrf.mxu0
    %v1184 = vadd.f32 0.0, %v1183
    %v1185 = vpop.f32.mrf.mxu0
    %1186 = vdwg.mxu0
    %1187 = vmatpush.bf16.msra.mxu0 0
    %1188 = vmatpush.bf16.msra.mxu0 0
    %1189 = vmatpush.bf16.msra.mxu0 0
    %1190 = vmatpush.bf16.msra.mxu0 0
    %1191 = vmatpush.bf16.msra.mxu0 %v1100
    %1192 = vmatpush.bf16.msra.mxu0 %v1098
    %1193 = vmatpush.bf16.msra.mxu0 %v1096
    %1194 = vmatpush.bf16.msra.mxu0 %v1094
    %1195 = vmatmul.bf16.gmra.mxu0 %v1172
    %v1196 = vpop.f32.mrf.mxu0
    %v1197 = vadd.f32 0.0, %v1196
    %v1198 = vpop.f32.mrf.mxu0
    %1199 = vdwg.mxu0
    %v1202 = vrot.slane %v1184, 6
    %v1203 = vrot.slane %v1197, 6
    %v1206 = vadd.f32 %v411, %v1202
    %v1207 = vadd.f32 %v425, %v1203
    %v1208 = vmul.f32 %v1206, 0.5
    %v1209 = vmul.f32 %v1207, 0.5
    %v1210 = vtanh.pop %v1208
    %v1211 = vtanh.pop %v1209
    %v1212 = vmul.f32 %v1210, 0.5
    %v1213 = vmul.f32 %v1211, 0.5
    %v1214 = vadd.f32 %v1212, 0.5
    %v1215 = vadd.f32 %v1213, 0.5
    %v1216 = vtanh.pop %v1207
    %v1218 = vrot.slane %v1163, 6
    %v1220 = vmul.f32 %v1214, %v1218
    %1222 = vrot.lane.b32.xlu0 %v1216, 64
    %v1223 = vpop.permute.xlu0 %1222
    %v1225 = vmul.f32 %v1214, %v1223
    %1227 = vrot.lane.b32.xlu0 %v1225, 64
    %v1228 = vpop.permute.xlu0 %1227
    %v1230 = vadd.f32 %v1220, %v1228
    %v1231 = vtanh.pop %v1230
    %1233 = vrot.lane.b32.xlu0 %v1231, 64
    %v1234 = vpop.permute.xlu0 %1233
    %v1236 = vmul.f32 %v1215, %v1234
    %v1237 = vpack.c.bf16 %v1236, %v1236
    %v1239 = vrot.slane %v1237, 1
    %v1241 = vsel %vm469, %v1239, 0
    %1243 = vmatpush.bf16.msra.mxu0 0
    %1244 = vmatpush.bf16.msra.mxu0 0
    %1245 = vmatpush.bf16.msra.mxu0 0
    %1246 = vmatpush.bf16.msra.mxu0 0
    %1247 = vmatpush.bf16.msra.mxu0 %v1099
    %1248 = vmatpush.bf16.msra.mxu0 %v1097
    %1249 = vmatpush.bf16.msra.mxu0 %v1095
    %1250 = vmatpush.bf16.msra.mxu0 %v1093
    %1251 = vmatmul.bf16.gmra.mxu0 %v1241
    %v1252 = vpop.f32.mrf.mxu0
    %v1253 = vadd.f32 0.0, %v1252
    %v1254 = vpop.f32.mrf.mxu0
    %1255 = vdwg.mxu0
    %1256 = vmatpush.bf16.msra.mxu0 0
    %1257 = vmatpush.bf16.msra.mxu0 0
    %1258 = vmatpush.bf16.msra.mxu0 0
    %1259 = vmatpush.bf16.msra.mxu0 0
    %1260 = vmatpush.bf16.msra.mxu0 %v1100
    %1261 = vmatpush.bf16.msra.mxu0 %v1098
    %1262 = vmatpush.bf16.msra.mxu0 %v1096
    %1263 = vmatpush.bf16.msra.mxu0 %v1094
    %1264 = vmatmul.bf16.gmra.mxu0 %v1241
    %v1265 = vpop.f32.mrf.mxu0
    %v1266 = vadd.f32 0.0, %v1265
    %v1267 = vpop.f32.mrf.mxu0
    %1268 = vdwg.mxu0
    %v1271 = vrot.slane %v1253, 4
    %v1272 = vrot.slane %v1266, 4
    %v1275 = vadd.f32 %v411, %v1271
    %v1276 = vadd.f32 %v425, %v1272
    %v1277 = vmul.f32 %v1275, 0.5
    %v1278 = vmul.f32 %v1276, 0.5
    %v1279 = vtanh.pop %v1277
    %v1280 = vtanh.pop %v1278
    %v1281 = vmul.f32 %v1279, 0.5
    %v1282 = vmul.f32 %v1280, 0.5
    %v1283 = vadd.f32 %v1281, 0.5
    %v1284 = vadd.f32 %v1282, 0.5
    %v1285 = vtanh.pop %v1276
    %v1287 = vrot.slane %v1230, 6
    %v1289 = vmul.f32 %v1283, %v1287
    %1291 = vrot.lane.b32.xlu0 %v1285, 64
    %v1292 = vpop.permute.xlu0 %1291
    %v1294 = vmul.f32 %v1283, %v1292
    %1296 = vrot.lane.b32.xlu0 %v1294, 64
    %v1297 = vpop.permute.xlu0 %1296
    %v1299 = vadd.f32 %v1289, %v1297
    %v1300 = vtanh.pop %v1299
    %1302 = vrot.lane.b32.xlu0 %v1300, 64
    %v1303 = vpop.permute.xlu0 %1302
    %v1305 = vmul.f32 %v1284, %v1303
    %v1306 = vpack.c.bf16 %v1305, %v1305
    %v1308 = vrot.slane %v1306, 2
    %v1310 = vsel %vm469, %v1308, 0
    %1312 = vmatpush.bf16.msra.mxu0 0
    %1313 = vmatpush.bf16.msra.mxu0 0
    %1314 = vmatpush.bf16.msra.mxu0 0
    %1315 = vmatpush.bf16.msra.mxu0 0
    %1316 = vmatpush.bf16.msra.mxu0 %v1099
    %1317 = vmatpush.bf16.msra.mxu0 %v1097
    %1318 = vmatpush.bf16.msra.mxu0 %v1095
    %1319 = vmatpush.bf16.msra.mxu0 %v1093
    %1320 = vmatmul.bf16.gmra.mxu0 %v1310
    %v1321 = vpop.f32.mrf.mxu0
    %v1322 = vadd.f32 0.0, %v1321
    %v1323 = vpop.f32.mrf.mxu0
    %1324 = vdwg.mxu0
    %1325 = vmatpush.bf16.msra.mxu0 0
    %1326 = vmatpush.bf16.msra.mxu0 0
    %1327 = vmatpush.bf16.msra.mxu0 0
    %1328 = vmatpush.bf16.msra.mxu0 0
    %1329 = vmatpush.bf16.msra.mxu0 %v1100
    %1330 = vmatpush.bf16.msra.mxu0 %v1098
    %1331 = vmatpush.bf16.msra.mxu0 %v1096
    %1332 = vmatpush.bf16.msra.mxu0 %v1094
    %1333 = vmatmul.bf16.gmra.mxu0 %v1310
    %v1334 = vpop.f32.mrf.mxu0
    %v1335 = vadd.f32 0.0, %v1334
    %v1336 = vpop.f32.mrf.mxu0
    %1337 = vdwg.mxu0
    %v1340 = vrot.slane %v1322, 2
    %v1341 = vrot.slane %v1335, 2
    %v1344 = vadd.f32 %v411, %v1340
    %v1345 = vadd.f32 %v425, %v1341
    %v1346 = vmul.f32 %v1344, 0.5
    %v1347 = vmul.f32 %v1345, 0.5
    %v1348 = vtanh.pop %v1346
    %v1349 = vtanh.pop %v1347
    %v1350 = vmul.f32 %v1348, 0.5
    %v1351 = vmul.f32 %v1349, 0.5
    %v1352 = vadd.f32 %v1350, 0.5
    %v1353 = vadd.f32 %v1351, 0.5
    %v1354 = vtanh.pop %v1345
    %v1356 = vrot.slane %v1299, 6
    %v1358 = vmul.f32 %v1352, %v1356
    %1360 = vrot.lane.b32.xlu0 %v1354, 64
    %v1361 = vpop.permute.xlu0 %1360
    %v1363 = vmul.f32 %v1352, %v1361
    %1365 = vrot.lane.b32.xlu0 %v1363, 64
    %v1366 = vpop.permute.xlu0 %1365
    %v1368 = vadd.f32 %v1358, %v1366
    %v1369 = vtanh.pop %v1368
    %1371 = vrot.lane.b32.xlu0 %v1369, 64
    %v1372 = vpop.permute.xlu0 %1371
    %v1374 = vmul.f32 %v1353, %v1372
    %v1375 = vpack.c.bf16 %v1374, %v1374
    %v1377 = vrot.slane %v1375, 3
    %v1379 = vsel %vm469, %v1377, 0
    %1381 = vmatpush.bf16.msra.mxu0 0
    %1382 = vmatpush.bf16.msra.mxu0 0
    %1383 = vmatpush.bf16.msra.mxu0 0
    %1384 = vmatpush.bf16.msra.mxu0 0
    %1385 = vmatpush.bf16.msra.mxu0 %v1099
    %1386 = vmatpush.bf16.msra.mxu0 %v1097
    %1387 = vmatpush.bf16.msra.mxu0 %v1095
    %1388 = vmatpush.bf16.msra.mxu0 %v1093
    %1389 = vmatmul.bf16.gmra.mxu0 %v1379
    %v1390 = vpop.f32.mrf.mxu0
    %v1391 = vadd.f32 0.0, %v1390
    %v1392 = vpop.f32.mrf.mxu0
    %1393 = vdwg.mxu0
    %1394 = vmatpush.bf16.msra.mxu0 0
    %1395 = vmatpush.bf16.msra.mxu0 0
    %1396 = vmatpush.bf16.msra.mxu0 0
    %1397 = vmatpush.bf16.msra.mxu0 0
    %1398 = vmatpush.bf16.msra.mxu0 %v1100
    %1399 = vmatpush.bf16.msra.mxu0 %v1098
    %1400 = vmatpush.bf16.msra.mxu0 %v1096
    %1401 = vmatpush.bf16.msra.mxu0 %v1094
    %1402 = vmatmul.bf16.gmra.mxu0 %v1379
    %v1403 = vpop.f32.mrf.mxu0
    %v1404 = vadd.f32 0.0, %v1403
    %v1405 = vpop.f32.mrf.mxu0
    %1406 = vdwg.mxu0
    %v1407 = vadd.f32 %v413, %v1391
    %v1408 = vadd.f32 %v427, %v1404
    %v1409 = vmul.f32 %v1407, 0.5
    %v1410 = vmul.f32 %v1408, 0.5
    %v1411 = vtanh.pop %v1409
    %v1412 = vtanh.pop %v1410
    %v1413 = vmul.f32 %v1411, 0.5
    %v1414 = vmul.f32 %v1412, 0.5
    %v1415 = vadd.f32 %v1413, 0.5
    %v1416 = vadd.f32 %v1414, 0.5
    %v1417 = vtanh.pop %v1408
    %v1419 = vrot.slane %v1368, 6
    %v1421 = vmul.f32 %v1415, %v1419
    %1423 = vrot.lane.b32.xlu0 %v1417, 64
    %v1424 = vpop.permute.xlu0 %1423
    %v1426 = vmul.f32 %v1415, %v1424
    %1428 = vrot.lane.b32.xlu0 %v1426, 64
    %v1429 = vpop.permute.xlu0 %1428
    %v1431 = vadd.f32 %v1421, %v1429
    %v1432 = vtanh.pop %v1431
    %1434 = vrot.lane.b32.xlu0 %v1432, 64
    %v1435 = vpop.permute.xlu0 %1434
    %v1437 = vmul.f32 %v1416, %v1435
    %v1438 = vpack.c.bf16 %v1437, %v1437
    %v1440 = vsel %vm469, %v1438, 0
    %1442 = vmatpush.bf16.msra.mxu0 0
    %1443 = vmatpush.bf16.msra.mxu0 0
    %1444 = vmatpush.bf16.msra.mxu0 0
    %1445 = vmatpush.bf16.msra.mxu0 0
    %1446 = vmatpush.bf16.msra.mxu0 %v1099
    %1447 = vmatpush.bf16.msra.mxu0 %v1097
    %1448 = vmatpush.bf16.msra.mxu0 %v1095
    %1449 = vmatpush.bf16.msra.mxu0 %v1093
    %1450 = vmatmul.bf16.gmra.mxu0 %v1440
    %v1451 = vpop.f32.mrf.mxu0
    %v1452 = vadd.f32 0.0, %v1451
    %v1453 = vpop.f32.mrf.mxu0
    %1454 = vdwg.mxu0
    %1455 = vmatpush.bf16.msra.mxu0 0
    %1456 = vmatpush.bf16.msra.mxu0 0
    %1457 = vmatpush.bf16.msra.mxu0 0
    %1458 = vmatpush.bf16.msra.mxu0 0
    %1459 = vmatpush.bf16.msra.mxu0 %v1100
    %1460 = vmatpush.bf16.msra.mxu0 %v1098
    %1461 = vmatpush.bf16.msra.mxu0 %v1096
    %1462 = vmatpush.bf16.msra.mxu0 %v1094
    %1463 = vmatmul.bf16.gmra.mxu0 %v1440
    %v1464 = vpop.f32.mrf.mxu0
    %v1465 = vadd.f32 0.0, %v1464
    %v1466 = vpop.f32.mrf.mxu0
    %1467 = vdwg.mxu0
    %v1470 = vrot.slane %v1452, 6
    %v1471 = vrot.slane %v1465, 6
    %v1474 = vadd.f32 %v413, %v1470
    %v1475 = vadd.f32 %v427, %v1471
    %v1476 = vmul.f32 %v1474, 0.5
    %v1477 = vmul.f32 %v1475, 0.5
    %v1478 = vtanh.pop %v1476
    %v1479 = vtanh.pop %v1477
    %v1480 = vmul.f32 %v1478, 0.5
    %v1481 = vmul.f32 %v1479, 0.5
    %v1482 = vadd.f32 %v1480, 0.5
    %v1483 = vadd.f32 %v1481, 0.5
    %v1484 = vtanh.pop %v1475
    %v1486 = vrot.slane %v1431, 6
    %v1488 = vmul.f32 %v1482, %v1486
    %1490 = vrot.lane.b32.xlu0 %v1484, 64
    %v1491 = vpop.permute.xlu0 %1490
    %v1493 = vmul.f32 %v1482, %v1491
    %1495 = vrot.lane.b32.xlu0 %v1493, 64
    %v1496 = vpop.permute.xlu0 %1495
    %v1498 = vadd.f32 %v1488, %v1496
    %v1499 = vtanh.pop %v1498
    %1501 = vrot.lane.b32.xlu0 %v1499, 64
    %v1502 = vpop.permute.xlu0 %1501
    %v1504 = vmul.f32 %v1483, %v1502
    %v1505 = vpack.c.bf16 %v1504, %v1504
    %v1507 = vrot.slane %v1505, 1
    %v1509 = vsel %vm469, %v1507, 0
    %1511 = vmatpush.bf16.msra.mxu0 0
    %1512 = vmatpush.bf16.msra.mxu0 0
    %1513 = vmatpush.bf16.msra.mxu0 0
    %1514 = vmatpush.bf16.msra.mxu0 0
    %1515 = vmatpush.bf16.msra.mxu0 %v1099
    %1516 = vmatpush.bf16.msra.mxu0 %v1097
    %1517 = vmatpush.bf16.msra.mxu0 %v1095
    %1518 = vmatpush.bf16.msra.mxu0 %v1093
    %1519 = vmatmul.bf16.gmra.mxu0 %v1509
    %v1520 = vpop.f32.mrf.mxu0
    %v1521 = vadd.f32 0.0, %v1520
    %v1522 = vpop.f32.mrf.mxu0
    %1523 = vdwg.mxu0
    %1524 = vmatpush.bf16.msra.mxu0 0
    %1525 = vmatpush.bf16.msra.mxu0 0
    %1526 = vmatpush.bf16.msra.mxu0 0
    %1527 = vmatpush.bf16.msra.mxu0 0
    %1528 = vmatpush.bf16.msra.mxu0 %v1100
    %1529 = vmatpush.bf16.msra.mxu0 %v1098
    %1530 = vmatpush.bf16.msra.mxu0 %v1096
    %1531 = vmatpush.bf16.msra.mxu0 %v1094
    %1532 = vmatmul.bf16.gmra.mxu0 %v1509
    %v1533 = vpop.f32.mrf.mxu0
    %v1534 = vadd.f32 0.0, %v1533
    %v1535 = vpop.f32.mrf.mxu0
    %1536 = vdwg.mxu0
    %v1539 = vrot.slane %v1521, 4
    %v1540 = vrot.slane %v1534, 4
    %v1543 = vadd.f32 %v413, %v1539
    %v1544 = vadd.f32 %v427, %v1540
    %v1545 = vmul.f32 %v1543, 0.5
    %v1546 = vmul.f32 %v1544, 0.5
    %v1547 = vtanh.pop %v1545
    %v1548 = vtanh.pop %v1546
    %v1549 = vmul.f32 %v1547, 0.5
    %v1550 = vmul.f32 %v1548, 0.5
    %v1551 = vadd.f32 %v1549, 0.5
    %v1552 = vadd.f32 %v1550, 0.5
    %v1553 = vtanh.pop %v1544
    %v1555 = vrot.slane %v1498, 6
    %v1557 = vmul.f32 %v1551, %v1555
    %1559 = vrot.lane.b32.xlu0 %v1553, 64
    %v1560 = vpop.permute.xlu0 %1559
    %v1562 = vmul.f32 %v1551, %v1560
    %1564 = vrot.lane.b32.xlu0 %v1562, 64
    %v1565 = vpop.permute.xlu0 %1564
    %v1567 = vadd.f32 %v1557, %v1565
    %v1568 = vtanh.pop %v1567
    %1570 = vrot.lane.b32.xlu0 %v1568, 64
    %v1571 = vpop.permute.xlu0 %1570
    %v1573 = vmul.f32 %v1552, %v1571
    %v1574 = vpack.c.bf16 %v1573, %v1573
    %v1576 = vrot.slane %v1574, 2
    %v1578 = vsel %vm469, %v1576, 0
    %1580 = vmatpush.bf16.msra.mxu0 0
    %1581 = vmatpush.bf16.msra.mxu0 0
    %1582 = vmatpush.bf16.msra.mxu0 0
    %1583 = vmatpush.bf16.msra.mxu0 0
    %1584 = vmatpush.bf16.msra.mxu0 %v1099
    %1585 = vmatpush.bf16.msra.mxu0 %v1097
    %1586 = vmatpush.bf16.msra.mxu0 %v1095
    %1587 = vmatpush.bf16.msra.mxu0 %v1093
    %1588 = vmatmul.bf16.gmra.mxu0 %v1578
    %v1589 = vpop.f32.mrf.mxu0
    %v1590 = vadd.f32 0.0, %v1589
    %v1591 = vpop.f32.mrf.mxu0
    %1592 = vdwg.mxu0
    %1593 = vmatpush.bf16.msra.mxu0 0
    %1594 = vmatpush.bf16.msra.mxu0 0
    %1595 = vmatpush.bf16.msra.mxu0 0
    %1596 = vmatpush.bf16.msra.mxu0 0
    %1597 = vmatpush.bf16.msra.mxu0 %v1100
    %1598 = vmatpush.bf16.msra.mxu0 %v1098
    %1599 = vmatpush.bf16.msra.mxu0 %v1096
    %1600 = vmatpush.bf16.msra.mxu0 %v1094
    %1601 = vmatmul.bf16.gmra.mxu0 %v1578
    %v1602 = vpop.f32.mrf.mxu0
    %v1603 = vadd.f32 0.0, %v1602
    %v1604 = vpop.f32.mrf.mxu0
    %1605 = vdwg.mxu0
    %v1608 = vrot.slane %v1590, 2
    %v1609 = vrot.slane %v1603, 2
    %v1612 = vadd.f32 %v413, %v1608
    %v1613 = vadd.f32 %v427, %v1609
    %v1614 = vmul.f32 %v1612, 0.5
    %v1615 = vmul.f32 %v1613, 0.5
    %v1616 = vtanh.pop %v1614
    %v1617 = vtanh.pop %v1615
    %v1618 = vmul.f32 %v1616, 0.5
    %v1619 = vmul.f32 %v1617, 0.5
    %v1620 = vadd.f32 %v1618, 0.5
    %v1621 = vadd.f32 %v1619, 0.5
    %v1622 = vtanh.pop %v1613
    %v1624 = vrot.slane %v1567, 6
    %v1626 = vmul.f32 %v1620, %v1624
    %1628 = vrot.lane.b32.xlu0 %v1622, 64
    %v1629 = vpop.permute.xlu0 %1628
    %v1631 = vmul.f32 %v1620, %v1629
    %1633 = vrot.lane.b32.xlu0 %v1631, 64
    %v1634 = vpop.permute.xlu0 %1633
    %v1636 = vadd.f32 %v1626, %v1634
    %v1637 = vtanh.pop %v1636
    %1639 = vrot.lane.b32.xlu0 %v1637, 64
    %v1640 = vpop.permute.xlu0 %1639
    %v1642 = vmul.f32 %v1621, %v1640
    %v1643 = vsel %vm1000, %v1169, %v1236
    %v1644 = vsel %vm1002, %v1643, %v1305
    %v1645 = vsel %vm1004, %v1644, %v1374
    %v1646 = vsel %vm1000, %v1437, %v1504
    %v1647 = vsel %vm1002, %v1646, %v1573
    %v1648 = vsel %vm1004, %v1647, %v1642
    %v1649 = vld [vmem:[#allocation7] sm:$0x3]
    %v1651 = vsel %vm1016, %v1649, 0
    %1653 = vmatpush.msra.mxu0 0.0
    %1654 = vmatpush.msra.mxu0 0.0
    %1655 = vmatpush.msra.mxu0 0.0
    %1656 = vmatpush.msra.mxu0 0.0
    %1657 = vmatpush.msra.mxu0 0.0
    %1658 = vmatpush.msra.mxu0 0.0
    %1659 = vmatpush.msra.mxu0 0.0
    %1660 = vmatpush.msra.mxu0 0.0
    %1661 = vmatpush.msra.mxu0 0.0
    %1662 = vmatpush.msra.mxu0 0.0
    %1663 = vmatpush.msra.mxu0 0.0
    %1664 = vmatpush.msra.mxu0 0.0
    %1665 = vmatpush.msra.mxu0 0.0
    %1666 = vmatpush.msra.mxu0 0.0
    %1667 = vmatpush.msra.mxu0 %v1648
    %1668 = vmatpush.msra.mxu0 %v1645
    %1669 = vmatmul.f32.gmra.mxu0 %v1651
    %v1670 = vpop.f32.mrf.mxu0
    %v1671 = vadd.f32 0.0, %v1670
    %1672 = vdwg.mxu0
    %v1673 = vpack.c.bf16 %v1671, %v1671
    %v1674 = vld [vmem:[#allocation16] sm:$0xf]
    %v1675 = vld [vmem:[#allocation16 + $0x4] sm:$0xf]
    %v1676 = vld [vmem:[#allocation16 + $0x8] sm:$0xf]
    %v1677 = vld [vmem:[#allocation16 + $0xc] sm:$0xf]
    %v1678 = vld [vmem:[#allocation16 + $0x10] sm:$0xf]
    %v1679 = vld [vmem:[#allocation16 + $0x14] sm:$0xf]
    %v1680 = vld [vmem:[#allocation16 + $0x18] sm:$0xf]
    %v1681 = vld [vmem:[#allocation16 + $0x1c] sm:$0xf]
    %v1690 = vunpack.c.l.b16 %v1674
    %v1691 = vunpack.c.l.b16 %v1675
    %v1692 = vunpack.c.l.b16 %v1676
    %v1693 = vunpack.c.l.b16 %v1677
    %v1694 = vunpack.c.l.b16 %v1678
    %v1695 = vunpack.c.l.b16 %v1679
    %v1696 = vunpack.c.l.b16 %v1680
    %v1697 = vunpack.c.l.b16 %v1681
    %v1698 = vpack.c.b16 %v1691, %v1690
    %v1699 = vpack.c.b16 %v1693, %v1692
    %v1700 = vpack.c.b16 %v1695, %v1694
    %v1701 = vpack.c.b16 %v1697, %v1696
    %v1707 = vsel %vm469, %v1673, 0
    %1709 = vmatpush.bf16.msra.mxu0 0
    %1710 = vmatpush.bf16.msra.mxu0 0
    %1711 = vmatpush.bf16.msra.mxu0 0
    %1712 = vmatpush.bf16.msra.mxu0 0
    %1713 = vmatpush.bf16.msra.mxu0 %v1701
    %1714 = vmatpush.bf16.msra.mxu0 %v1700
    %1715 = vmatpush.bf16.msra.mxu0 %v1699
    %1716 = vmatpush.bf16.msra.mxu0 %v1698
    %1717 = vmatmul.bf16.gmra.mxu0 %v1707
    %v1718 = vpop.f32.mrf.mxu0
    %v1719 = vadd.f32 0.0, %v1718
    %v1720 = vpop.f32.mrf.mxu0
    %1721 = vdwg.mxu0
    %v1723 = vrot.slane %v1719, 6
    %v1725 = vrot.slane %v1719, 4
    %v1727 = vrot.slane %v1719, 2
    %v1729 = vsel %vm1000, %v1719, %v1723
    %v1730 = vsel %vm1002, %v1729, %v1725
    %v1731 = vsel %vm1004, %v1730, %v1727
    %v1732 = vpack.c.bf16 %v1008, %v1005
    %v1733 = vld [vmem:[#allocation14] sm:$0xf]
    %v1734 = vld [vmem:[#allocation14 + $0x4] sm:$0xf]
    %v1735 = vld [vmem:[#allocation14 + $0x8] sm:$0xf]
    %v1736 = vld [vmem:[#allocation14 + $0xc] sm:$0xf]
    %v1737 = vld [vmem:[#allocation14 + $0x10] sm:$0xf]
    %v1738 = vld [vmem:[#allocation14 + $0x14] sm:$0xf]
    %v1739 = vld [vmem:[#allocation14 + $0x18] sm:$0xf]
    %v1740 = vld [vmem:[#allocation14 + $0x1c] sm:$0xf]
    %v1749 = vunpack.c.l.b16 %v1733
    %v1750 = vunpack.c.l.b16 %v1734
    %v1751 = vunpack.c.l.b16 %v1735
    %v1752 = vunpack.c.l.b16 %v1736
    %v1753 = vunpack.c.l.b16 %v1737
    %v1754 = vunpack.c.l.b16 %v1738
    %v1755 = vunpack.c.l.b16 %v1739
    %v1756 = vunpack.c.l.b16 %v1740
    %v1757 = vpack.c.b16 %v1750, %v1749
    %v1758 = vpack.c.b16 %v1752, %v1751
    %v1759 = vpack.c.b16 %v1754, %v1753
    %v1760 = vpack.c.b16 %v1756, %v1755
    %v1766 = vsel %vm469, %v1732, 0
    %1768 = vmatpush.bf16.msra.mxu0 0
    %1769 = vmatpush.bf16.msra.mxu0 0
    %1770 = vmatpush.bf16.msra.mxu0 0
    %1771 = vmatpush.bf16.msra.mxu0 0
    %1772 = vmatpush.bf16.msra.mxu0 %v1760
    %1773 = vmatpush.bf16.msra.mxu0 %v1759
    %1774 = vmatpush.bf16.msra.mxu0 %v1758
    %1775 = vmatpush.bf16.msra.mxu0 %v1757
    %1776 = vmatmul.bf16.gmra.mxu0 %v1766
    %v1777 = vpop.f32.mrf.mxu0
    %v1778 = vadd.f32 %v1731, %v1777
    %v1779 = vpop.f32.mrf.mxu0
    %v1780 = vadd.f32 %v1731, %v1779
    %1781 = vdwg.mxu0
    %v1782 = vtanh.pop %v1778
    %v1783 = vtanh.pop %v1780
    %v1784 = vpack.c.bf16 %v1783, %v1782
    %v1785 = vld [vmem:[%s14] sm:$0xf]
    %v1786 = vld [vmem:[%s14 + $0x4] sm:$0xf]
    %v1787 = vld [vmem:[%s14 + $0x8] sm:$0xf]
    %v1788 = vld [vmem:[%s14 + $0xc] sm:$0xf]
    %v1789 = vld [vmem:[%s14 + $0x10] sm:$0xf]
    %v1790 = vld [vmem:[%s14 + $0x14] sm:$0xf]
    %v1791 = vld [vmem:[%s14 + $0x18] sm:$0xf]
    %v1792 = vld [vmem:[%s14 + $0x1c] sm:$0xf]
    %v1801 = vunpack.c.l.b16 %v1785
    %v1802 = vunpack.c.l.b16 %v1786
    %v1803 = vunpack.c.l.b16 %v1787
    %v1804 = vunpack.c.l.b16 %v1788
    %v1805 = vunpack.c.l.b16 %v1789
    %v1806 = vunpack.c.l.b16 %v1790
    %v1807 = vunpack.c.l.b16 %v1791
    %v1808 = vunpack.c.l.b16 %v1792
    %v1809 = vpack.c.b16 %v1802, %v1801
    %v1810 = vpack.c.b16 %v1804, %v1803
    %v1811 = vpack.c.b16 %v1806, %v1805
    %v1812 = vpack.c.b16 %v1808, %v1807
    %v1818 = vsel %vm469, %v1784, 0
    %1820 = vmatpush.bf16.msra.mxu0 0
    %1821 = vmatpush.bf16.msra.mxu0 0
    %1822 = vmatpush.bf16.msra.mxu0 0
    %1823 = vmatpush.bf16.msra.mxu0 0
    %1824 = vmatpush.bf16.msra.mxu0 %v1812
    %1825 = vmatpush.bf16.msra.mxu0 %v1811
    %1826 = vmatpush.bf16.msra.mxu0 %v1810
    %1827 = vmatpush.bf16.msra.mxu0 %v1809
    %1828 = vmatmul.bf16.gmra.mxu0 %v1818
    %v1829 = vpop.f32.mrf.mxu0
    %v1830 = vadd.f32 0.0, %v1829
    %v1831 = vpop.f32.mrf.mxu0
    %v1832 = vadd.f32 0.0, %v1831
    %1833 = vdwg.mxu0
    %v1834 = vld [vmem:[%s5] sm:$0xff]
    %v1835 = vld [vmem:[%s5 + $0x8] sm:$0xff]
    %v1836 = vmul.f32 %v1834, %v1830
    %v1837 = vmul.f32 %v1835, %v1832
    %v1838 = vsub.f32 1.0, %v1834
    %v1839 = vsub.f32 1.0, %v1835
    %v1840 = vmul.f32 %v1838, 1e+12
    %v1841 = vmul.f32 %v1839, 1e+12
    %v1842 = vsub.f32 %v1836, %v1840
    %v1843 = vsub.f32 %v1837, %v1841
    %vm1844 = vcmask 7168
    %v1845 = vsel %vm1844, %v1842, -inf
    %v1846 = vsel %vm1844, %v1843, -inf
    %v1847 = vmax.f32 %v1845, %v1846
    %v1848 = vrot.slane %v1847, 4
    %v1849 = vmax.f32 %v1847, %v1848
    %v1850 = vrot.slane %v1849, 2
    %v1851 = vmax.f32 %v1849, %v1850
    %v1852 = vrot.slane %v1851, 1
    %v1853 = vmax.f32 %v1851, %v1852
    %v1854 = vsub.f32 %v1842, %v1853
    %v1855 = vsub.f32 %v1843, %v1853
    %v1856 = vmul.f32 %v1854, 1.442695
    %v1857 = vpow.pop %v1856
    %v1858 = vmul.f32 %v1855, 1.442695
    %v1859 = vpow.pop %v1858
    %v1861 = vsel %vm1016, %v242, 0
    %1863 = vmatpush.msra.mxu0 0.0
    %1864 = vmatpush.msra.mxu0 0.0
    %1865 = vmatpush.msra.mxu0 0.0
    %1866 = vmatpush.msra.mxu0 0.0
    %1867 = vmatpush.msra.mxu0 0.0
    %1868 = vmatpush.msra.mxu0 0.0
    %1869 = vmatpush.msra.mxu0 0.0
    %1870 = vmatpush.msra.mxu0 0.0
    %1871 = vmatpush.msra.mxu0 0.0
    %1872 = vmatpush.msra.mxu0 0.0
    %1873 = vmatpush.msra.mxu0 0.0
    %1874 = vmatpush.msra.mxu0 0.0
    %1875 = vmatpush.msra.mxu0 0.0
    %1876 = vmatpush.msra.mxu0 0.0
    %1877 = vmatpush.msra.mxu0 %v1859
    %1878 = vmatpush.msra.mxu0 %v1857
    %1879 = vmatmul.f32.gmra.mxu0 %v1861
    %v1880 = vpop.f32.mrf.mxu0
    %v1881 = vadd.f32 0.0, %v1880
    %1882 = vdwg.mxu0
    %v1883 = vrcp.pop %v1881
    %v1885 = vrot.slane %v1883, 6
    %v1887 = vrot.slane %v1883, 4
    %v1889 = vrot.slane %v1883, 2
    %v1891 = vsel %vm1000, %v1883, %v1885
    %v1892 = vsel %vm1002, %v1891, %v1887
    %v1893 = vsel %vm1004, %v1892, %v1889
    %v1894 = vmul.f32 %v1857, %v1893
    %v1895 = vmul.f32 %v1859, %v1893
    %1897 = vset.pattern.permute.xlu0 0
    %1898 = vperm.xlu0 %1897, %v1894
    %v1899 = vpop.permute.xlu0 %1898
    %1902 = vset.pattern.permute.xlu0 0
    %1903 = vperm.xlu0 %1902, %v1895
    %v1904 = vpop.permute.xlu0 %1903
    %v1906 = vmul.f32 %v1899, %v1005
    %v1907 = vmul.f32 %v1904, %v1008
    %1908 = vmatpush.msra.mxu0 0.0
    %1909 = vmatpush.msra.mxu0 0.0
    %1910 = vmatpush.msra.mxu0 0.0
    %1911 = vmatpush.msra.mxu0 0.0
    %1912 = vmatpush.msra.mxu0 0.0
    %1913 = vmatpush.msra.mxu0 0.0
    %1914 = vmatpush.msra.mxu0 0.0
    %1915 = vmatpush.msra.mxu0 0.0
    %1916 = vmatpush.msra.mxu0 0.0
    %1917 = vmatpush.msra.mxu0 0.0
    %1918 = vmatpush.msra.mxu0 0.0
    %1919 = vmatpush.msra.mxu0 0.0
    %1920 = vmatpush.msra.mxu0 0.0
    %1921 = vmatpush.msra.mxu0 0.0
    %1922 = vmatpush.msra.mxu0 %v1907
    %1923 = vmatpush.msra.mxu0 %v1906
    %1924 = vmatmul.f32.gmra.mxu0 %v1861
    %v1925 = vpop.f32.mrf.mxu0
    %v1926 = vadd.f32 0.0, %v1925
    %1927 = vdwg.mxu0
    %1929 = vrot.lane.b32.xlu0 %v1671, 64
    %v1930 = vpop.permute.xlu0 %1929
    %v1932 = vsel %vm469, %v1926, %v1930
    %v1933 = vpack.c.bf16 %v1932, %v1932
    %v1934 = vld [vmem:[%s15] sm:$0xf]
    %v1935 = vld [vmem:[%s15 + $0x4] sm:$0xf]
    %v1936 = vld [vmem:[%s15 + $0x8] sm:$0xf]
    %v1937 = vld [vmem:[%s15 + $0xc] sm:$0xf]
    %v1938 = vld [vmem:[%s15 + $0x10] sm:$0xf]
    %v1939 = vld [vmem:[%s15 + $0x14] sm:$0xf]
    %v1940 = vld [vmem:[%s15 + $0x18] sm:$0xf]
    %v1941 = vld [vmem:[%s15 + $0x1c] sm:$0xf]
    %v1942 = vld [vmem:[%s15 + $0x20] sm:$0xf]
    %v1943 = vld [vmem:[%s15 + $0x24] sm:$0xf]
    %v1944 = vld [vmem:[%s15 + $0x28] sm:$0xf]
    %v1945 = vld [vmem:[%s15 + $0x2c] sm:$0xf]
    %v1946 = vld [vmem:[%s15 + $0x30] sm:$0xf]
    %v1947 = vld [vmem:[%s15 + $0x34] sm:$0xf]
    %v1948 = vld [vmem:[%s15 + $0x38] sm:$0xf]
    %v1949 = vld [vmem:[%s15 + $0x3c] sm:$0xf]
    %v1966 = vunpack.c.l.b16 %v1934
    %v1967 = vunpack.c.l.b16 %v1935
    %v1968 = vunpack.c.l.b16 %v1936
    %v1969 = vunpack.c.l.b16 %v1937
    %v1970 = vunpack.c.l.b16 %v1938
    %v1971 = vunpack.c.l.b16 %v1939
    %v1972 = vunpack.c.l.b16 %v1940
    %v1973 = vunpack.c.l.b16 %v1941
    %v1974 = vunpack.c.l.b16 %v1942
    %v1975 = vunpack.c.l.b16 %v1943
    %v1976 = vunpack.c.l.b16 %v1944
    %v1977 = vunpack.c.l.b16 %v1945
    %v1978 = vunpack.c.l.b16 %v1946
    %v1979 = vunpack.c.l.b16 %v1947
    %v1980 = vunpack.c.l.b16 %v1948
    %v1981 = vunpack.c.l.b16 %v1949
    %v1982 = vpack.c.b16 %v1967, %v1966
    %v1983 = vpack.c.b16 %v1969, %v1968
    %v1984 = vpack.c.b16 %v1971, %v1970
    %v1985 = vpack.c.b16 %v1973, %v1972
    %v1986 = vpack.c.b16 %v1975, %v1974
    %v1987 = vpack.c.b16 %v1977, %v1976
    %v1988 = vpack.c.b16 %v1979, %v1978
    %v1989 = vpack.c.b16 %v1981, %v1980
    %1998 = vmatpush.bf16.msra.mxu0 %v1989
    %1999 = vmatpush.bf16.msra.mxu0 %v1988
    %2000 = vmatpush.bf16.msra.mxu0 %v1987
    %2001 = vmatpush.bf16.msra.mxu0 %v1986
    %2002 = vmatpush.bf16.msra.mxu0 %v1985
    %2003 = vmatpush.bf16.msra.mxu0 %v1984
    %2004 = vmatpush.bf16.msra.mxu0 %v1983
    %2005 = vmatpush.bf16.msra.mxu0 %v1982
    %2006 = vmatmul.bf16.gmra.mxu0 %v1933
    %v2007 = vpop.f32.mrf.mxu0
    %v2008 = vadd.f32 0.0, %v2007
    %v2009 = vpop.f32.mrf.mxu0
    %2010 = vdwg.mxu0
    %v2011 = vtanh.pop %v2008
    %v2012 = vpack.c.bf16 %v2011, %v2011
    %v2013 = vld [vmem:[#allocation17] sm:$0xf]
    %v2014 = vld [vmem:[#allocation17 + $0x4] sm:$0xf]
    %v2015 = vld [vmem:[#allocation17 + $0x8] sm:$0xf]
    %v2016 = vld [vmem:[#allocation17 + $0xc] sm:$0xf]
    %v2017 = vld [vmem:[#allocation17 + $0x10] sm:$0xf]
    %v2018 = vld [vmem:[#allocation17 + $0x14] sm:$0xf]
    %v2019 = vld [vmem:[#allocation17 + $0x18] sm:$0xf]
    %v2020 = vld [vmem:[#allocation17 + $0x1c] sm:$0xf]
    %v2021 = vld [vmem:[#allocation19] sm:$0x1]
    %v2023 = vperm.slane %v2021, 0
    %v2033 = vunpack.c.l.b16 %v2013
    %v2034 = vunpack.c.l.b16 %v2014
    %v2035 = vunpack.c.l.b16 %v2015
    %v2036 = vunpack.c.l.b16 %v2016
    %v2037 = vunpack.c.l.b16 %v2017
    %v2038 = vunpack.c.l.b16 %v2018
    %v2039 = vunpack.c.l.b16 %v2019
    %v2040 = vunpack.c.l.b16 %v2020
    %v2041 = vpack.c.b16 %v2034, %v2033
    %v2042 = vpack.c.b16 %v2036, %v2035
    %v2043 = vpack.c.b16 %v2038, %v2037
    %v2044 = vpack.c.b16 %v2040, %v2039
    %v2050 = vsel %vm469, %v2012, 0
    %2052 = vmatpush.bf16.msra.mxu0 0
    %2053 = vmatpush.bf16.msra.mxu0 0
    %2054 = vmatpush.bf16.msra.mxu0 0
    %2055 = vmatpush.bf16.msra.mxu0 0
    %2056 = vmatpush.bf16.msra.mxu0 %v2044
    %2057 = vmatpush.bf16.msra.mxu0 %v2043
    %2058 = vmatpush.bf16.msra.mxu0 %v2042
    %2059 = vmatpush.bf16.msra.mxu0 %v2041
    %2060 = vmatmul.bf16.gmra.mxu0 %v2050
    %v2061 = vpop.f32.mrf.mxu0
    %v2062 = vadd.f32 %v2023, %v2061
    %v2063 = vpop.f32.mrf.mxu0
    %2064 = vdwg.mxu0
    %v2065 = vtanh.pop %v2062
    %v2066 = vpack.c.bf16 %v2065, %v2065
    %v2067 = vld [vmem:[%s18] sm:$0xf]
    %v2068 = vld [vmem:[%s18 + $0x4] sm:$0xf]
    %v2069 = vld [vmem:[%s18 + $0x8] sm:$0xf]
    %v2070 = vld [vmem:[%s18 + $0xc] sm:$0xf]
    %v2071 = vld [vmem:[%s18 + $0x10] sm:$0xf]
    %v2072 = vld [vmem:[%s18 + $0x14] sm:$0xf]
    %v2073 = vld [vmem:[%s18 + $0x18] sm:$0xf]
    %v2074 = vld [vmem:[%s18 + $0x1c] sm:$0xf]
    %v2075 = vld [vmem:[%s18 + $0x20] sm:$0xf]
    %v2076 = vld [vmem:[%s18 + $0x24] sm:$0xf]
    %v2077 = vld [vmem:[%s18 + $0x28] sm:$0xf]
    %v2078 = vld [vmem:[%s18 + $0x2c] sm:$0xf]
    %v2079 = vld [vmem:[%s18 + $0x30] sm:$0xf]
    %v2080 = vld [vmem:[%s18 + $0x34] sm:$0xf]
    %v2081 = vld [vmem:[%s18 + $0x38] sm:$0xf]
    %v2082 = vld [vmem:[%s18 + $0x3c] sm:$0xf]
    %v2083 = vld [vmem:[%s19] sm:$0x1]
    %v2085 = vperm.slane %v2083, 0
    %v2103 = vunpack.c.l.b16 %v2067
    %v2104 = vunpack.c.l.b16 %v2068
    %v2105 = vunpack.c.l.b16 %v2069
    %v2106 = vunpack.c.l.b16 %v2070
    %v2107 = vunpack.c.l.b16 %v2071
    %v2108 = vunpack.c.l.b16 %v2072
    %v2109 = vunpack.c.l.b16 %v2073
    %v2110 = vunpack.c.l.b16 %v2074
    %v2111 = vunpack.c.l.b16 %v2075
    %v2112 = vunpack.c.l.b16 %v2076
    %v2113 = vunpack.c.l.b16 %v2077
    %v2114 = vunpack.c.l.b16 %v2078
    %v2115 = vunpack.c.l.b16 %v2079
    %v2116 = vunpack.c.l.b16 %v2080
    %v2117 = vunpack.c.l.b16 %v2081
    %v2118 = vunpack.c.l.b16 %v2082
    %v2119 = vpack.c.b16 %v2104, %v2103
    %v2120 = vpack.c.b16 %v2106, %v2105
    %v2121 = vpack.c.b16 %v2108, %v2107
    %v2122 = vpack.c.b16 %v2110, %v2109
    %v2123 = vpack.c.b16 %v2112, %v2111
    %v2124 = vpack.c.b16 %v2114, %v2113
    %v2125 = vpack.c.b16 %v2116, %v2115
    %v2126 = vpack.c.b16 %v2118, %v2117
    %2135 = vmatpush.bf16.msra.mxu0 %v2126
    %2136 = vmatpush.bf16.msra.mxu0 %v2125
    %2137 = vmatpush.bf16.msra.mxu0 %v2124
    %2138 = vmatpush.bf16.msra.mxu0 %v2123
    %2139 = vmatpush.bf16.msra.mxu0 %v2122
    %2140 = vmatpush.bf16.msra.mxu0 %v2121
    %2141 = vmatpush.bf16.msra.mxu0 %v2120
    %2142 = vmatpush.bf16.msra.mxu0 %v2119
    %2143 = vmatmul.bf16.gmra.mxu0 %v2066
    %v2144 = vpop.f32.mrf.mxu0
    %v2145 = vadd.f32 %v2085, %v2144
    %v2146 = vpop.f32.mrf.mxu0
    %2147 = vdwg.mxu0
    %vm2148 = vcmask 25600
    %2149 = vst.msk [vmem:[#allocation20] sm:$0x3] %vm2148, %v2145
    // Predicated region
    $region126: #{tpu_custom_call.1} parent=1 // pred_check
      _
    $region127: #{tpu_custom_call.1} parent=1 // pred_check_branch
      %2151 = sbr.rel (0) target = $region129
    $region128: #{tpu_custom_call.1} parent=1 // pred_region
      %2153 = vsyncadd [#allocation4], 0
      %s2155 = sshll.u32 [#allocation20], 4
      %s2156 = int_to_ptr.vmem [resolvable:$true] %s2155
      %s2157 = sshll.u32 %s20, 4
      %s2158 = int_to_ptr.hbm [resolvable:$true] %s2157
      %2160 = dma.vmem_to_hbm [thread:$0]  %s2156, 32, %s2158, [#allocation4]
    $region129: #{tpu_custom_call.1} parent=1 // pred_fallthru
      _
    // Predicated region
    $region130: #{tpu_custom_call.1} parent=1 // pred_check
      _
    $region131: #{tpu_custom_call.1} parent=1 // pred_check_branch
      %2162 = sbr.rel (0) target = $region133
    $region132: #{tpu_custom_call.1} parent=1 // pred_region
      %2164 = dma.done [#allocation4], 32
    $region133: #{tpu_custom_call.1} parent=1 // pred_fallthru
      _
    %2165 = vsyncpa [#allocation3], 1
    %2166 = vsyncpa [#allocation6], 1
    %2167 = vsyncpa [#allocation9], 1
    %2168 = vsyncpa [#allocation12], 1
    %2169 = vsyncpa [#allocation15], 1
    %2170 = vsyncpa [#allocation18], 1
    %2171 = vsyncpa [#allocation4], 1

</llo_original>
